<compile_context>
chip_gen: v7x
topology: tpu7x:2x2x1
jax: 0.10.0
libtpu: 0.0.40
codegen_flags: <defaults>
</compile_context>

<pallas_src>
import functools

import jax
import jax.numpy as jnp
from jax.experimental import pallas as pl
from jax.experimental.pallas import tpu as pltpu


def _attention_kernel(x_ref, wqkv_ref, wo_ref, bo_ref, o_ref, *,
                      num_heads, head_dim):
    TB, N, C = x_ref.shape
    D = head_dim
    cdt = x_ref.dtype                      # compute dtype (bf16 by default)

    # Fused QKV projection: one wide (TB*N, C) @ (C, 3C) MXU pass, f32 accum.
    # TODO(synk): when N % 8 != 0 (e.g. ViT N=197) this row-merge reshape
    # crosses the (8,128) sublane tile -> relayout copy; pad N in the wrapper.
    x2 = x_ref[...].reshape(TB * N, C)
    qkv = jnp.dot(x2, wqkv_ref[...], preferred_element_type=jnp.float32)

    # Native-dtype (bf16) operands into every subsequent MXU pass.
    q = qkv[:, 0 * C:1 * C].astype(cdt)    # scale pre-folded into these columns
    k = qkv[:, 1 * C:2 * C].astype(cdt)
    v = qkv[:, 2 * C:3 * C].astype(cdt)

    # Per-head attention (num_heads is a small static constant -> unrolled).
    # TODO(synk): for long sequences a flash-style KV-tiled inner loop is
    # needed; the full (TB, N, N) score tile per head is fine at ViT scale.
    heads = []
    for h in range(num_heads):
        lo = h * D
        qh = q[:, lo:lo + D].reshape(TB, N, D)
        kh = k[:, lo:lo + D].reshape(TB, N, D)
        vh = v[:, lo:lo + D].reshape(TB, N, D)

        # scores (TB, N, N): contract D via einsum dims (no explicit .T).
        s = jnp.einsum('bqd,bkd->bqk', qh, kh,
                       preferred_element_type=jnp.float32)

        # numerically-stable softmax along keys, f32 math, EUP reciprocal.
        s = s - jnp.max(s, axis=-1, keepdims=True)
        p = jnp.exp(s)
        p = p * pl.reciprocal(jnp.sum(p, axis=-1, keepdims=True), approx=True)
        p = p.astype(cdt)                  # bf16 probabilities into the MXU

        oh = jnp.einsum('bqk,bkd->bqd', p, vh,
                        preferred_element_type=jnp.float32)
        heads.append(oh.astype(cdt))

    # Merge heads into a lane-dense (TB*N, C) slab and run ONE K=C projection.
    out_all = jnp.concatenate(heads, axis=-1).reshape(TB * N, C)
    y = jnp.dot(out_all, wo_ref[...], preferred_element_type=jnp.float32)
    y = y + bo_ref[...].astype(jnp.float32)          # (1, C) bias broadcast
    o_ref[...] = y.reshape(TB, N, C).astype(o_ref.dtype)


def _working_set_bytes(tb, N, C, H):
    """Rough per-grid-step VMEM working set (bytes), used to size the block."""
    bf16, f32 = 2, 4
    rows = tb * N
    io_blocks = 2 * rows * C * bf16 + 2 * rows * C * f32   # x (dbl-buf) + out (dbl-buf)
    weights = (3 * C * C + C * C) * bf16 + C * f32         # single-buffered weights + bias
    interm = rows * 3 * C * f32                            # fused qkv accumulator
    interm += rows * 3 * C * bf16                          # q/k/v bf16 copies
    interm += 2 * tb * N * N * f32                         # live score/prob tiles
    interm += rows * C * bf16 + rows * C * f32             # merged heads + proj accum
    return io_blocks + weights + interm


def attention_pallas(x, params, num_heads, block_b=None,
                     compute_dtype=jnp.bfloat16):
    """x: (B, N, C).  params: {'wqkv': (C,3C), 'wo': (C,C), 'bo': (1,C)}."""
    B, N, C = x.shape
    assert C % num_heads == 0
    D = C // num_heads
    scale = D ** (-0.5)
    out_dtype = x.dtype

    # Fold the attention scale into the Q columns of the fused QKV weight in
    # f32 FIRST, then cast to the bf16 compute dtype (MXU-native on all gens).
    wqkv = params["wqkv"].astype(jnp.float32)
    wqkv = jnp.concatenate([wqkv[:, :C] * scale, wqkv[:, C:]], axis=-1)
    wqkv = wqkv.astype(compute_dtype)
    wo = params["wo"].astype(compute_dtype)
    bo = params["bo"].astype(jnp.float32)    # tiny; kept f32 (added in f32)
    x_c = x.astype(compute_dtype)

    # Pick TB = sequences per grid step.
    if block_b is None:
        target_rows = 1024                   # M-fill for the 256-wide MXU
        block_b = max(1, min(B, max(1, target_rows // max(N, 1))))
        if B > 1:                            # >= 2 grid steps -> v7x's 2 TCs both work
            block_b = min(block_b, max(1, B // 2))
        budget = 40 * 1024 * 1024            # conservative (fits v7x 64 MiB VMEM)
        while block_b > 1 and _working_set_bytes(block_b, N, C, num_heads) > budget:
            block_b -= 1
        while B % block_b != 0:              # keep the grid an exact tiling of B
            block_b -= 1
    TB = block_b
    grid = (B // TB,)

    kernel = functools.partial(_attention_kernel,
                               num_heads=num_heads, head_dim=D)

    # TODO(synk): for ViT-scale C >= ~1536 on v7x, tile the weight C_out dim
    # on a second ('arbitrary') grid axis instead of holding weights resident.
    def build(single_buffer_weights):
        wkw = ({"pipeline_mode": pl.Buffered(1)}
               if single_buffer_weights else {})
        w_spec = lambda shape: pl.BlockSpec(
            shape, lambda b: (0,) * len(shape), **wkw)
        return pl.pallas_call(
            kernel,
            out_shape=jax.ShapeDtypeStruct((B, N, C), out_dtype),
            grid_spec=pltpu.PrefetchScalarGridSpec(
                num_scalar_prefetch=0,
                grid=grid,
                in_specs=[
                    pl.BlockSpec((TB, N, C), lambda b: (b, 0, 0)),  # x
                    w_spec((C, 3 * C)),                             # fused Wqkv
                    w_spec((C, C)),                                 # Wo
                    w_spec((1, C)),                                 # bo
                ],
                out_specs=pl.BlockSpec((TB, N, C), lambda b: (b, 0, 0)),
            ),
            compiler_params=pltpu.CompilerParams(
                dimension_semantics=("parallel",),
                vmem_limit_bytes=64 * 1024 * 1024,
            ),
        )

    try:
        return build(True)(x_c, wqkv, wo, bo)
    except Exception:
        # TODO(synk): drop this fallback once pl.Buffered(1) single-buffering
        # of grid-invariant weights is confirmed on the target jax/libtpu.
        return build(False)(x_c, wqkv, wo, bo)


def attention_ref(x, params, num_heads):
    """Pure-JAX f32 reference mirroring the PyTorch forward (eval mode)."""
    B, N, C = x.shape
    D = C // num_heads
    scale = D ** (-0.5)
    qkv = x @ params["wqkv"]                                   # (B, N, 3C)
    q, k, v = jnp.split(qkv, 3, axis=-1)
    to_heads = lambda t: t.reshape(B, N, num_heads, D).transpose(0, 2, 1, 3)
    q, k, v = map(to_heads, (q, k, v))                         # (B, H, N, D)
    dots = jnp.einsum('bhqd,bhkd->bhqk', q, k) * scale         # (B, H, N, N)
    attn = jax.nn.softmax(dots, axis=-1)
    out = jnp.einsum('bhqk,bhkd->bhqd', attn, v)               # (B, H, N, D)
    out = out.transpose(0, 2, 1, 3).reshape(B, N, C)
    return out @ params["wo"] + params["bo"]


def init_params(key, hidden_dim):
    ks = jax.random.split(key, 3)
    s = 1.0 / float(hidden_dim) ** 0.5
    mk = lambda k, shape: jax.random.uniform(k, shape, jnp.float32, -s, s)
    return {
        # stored as (C_in, C_out), i.e. torch weight transposed
        "wqkv": mk(ks[0], (hidden_dim, 3 * hidden_dim)),  # to_qkv (bias=False)
        "wo":   mk(ks[1], (hidden_dim, hidden_dim)),      # to_out Linear
        "bo":   mk(ks[2], (1, hidden_dim)),
    }


if __name__ == "__main__":
    B, N, C = 2, 8, 32
    num_heads = 4

    key = jax.random.PRNGKey(0)
    kx, kp = jax.random.split(key)
    x = jax.random.normal(kx, (B, N, C), dtype=jnp.float32)
    params = init_params(kp, C)

    out = attention_pallas(x, params, num_heads)
    out = jax.block_until_ready(out)

    ref = attention_ref(x, params, num_heads)
    assert out.shape == (B, N, C)
    err = jnp.max(jnp.abs(out - ref))
    # Tolerance covers bf16 MXU operands + the approx (EUP) softmax reciprocal.
    assert jnp.allclose(out, ref, atol=3e-2, rtol=3e-2), \
        f"mismatch vs reference (max abs err {err})"

    print("KERNEL_OK")
</pallas_src>

<mosaic_0001>
module attributes {stable_mosaic.version = 11 : i64} {
  func.func @_attention_kernel(%arg0: i32, %arg1: memref<1x8x32xbf16, #tpu.memory_space<vmem>>, %arg2: memref<32x96xbf16, #tpu.memory_space<vmem>>, %arg3: memref<32x32xbf16, #tpu.memory_space<vmem>>, %arg4: memref<1x32xf32, #tpu.memory_space<vmem>>, %arg5: memref<1x8x32xf32, #tpu.memory_space<vmem>>) attributes {dimension_semantics = [#tpu.dimension_semantics<parallel>], iteration_bounds = array<i64: 2>, scalar_prefetch = 0 : i64, scratch_operands = 0 : i64, tpu.core_type = #tpu.core_type<tc>, window_params = [{transform_indices = @transform_0, window_bounds = array<i64: 1, 8, 32>}, {pipeline_mode = #tpu.pipeline_mode<synchronous>, transform_indices = @transform_1, window_bounds = array<i64: 32, 96>}, {pipeline_mode = #tpu.pipeline_mode<synchronous>, transform_indices = @transform_2, window_bounds = array<i64: 32, 32>}, {pipeline_mode = #tpu.pipeline_mode<synchronous>, transform_indices = @transform_3, window_bounds = array<i64: 1, 32>}, {transform_indices = @transform_4, window_bounds = array<i64: 1, 8, 32>}]} {
    %c0 = arith.constant 0 : index
    %c0_0 = arith.constant 0 : index
    %c0_1 = arith.constant 0 : index
    %0 = vector.load %arg1[%c0, %c0_0, %c0_1] : memref<1x8x32xbf16, #tpu.memory_space<vmem>>, vector<1x8x32xbf16>
    %1 = vector.shape_cast %0 : vector<1x8x32xbf16> to vector<8x32xbf16>
    %c0_2 = arith.constant 0 : index
    %c0_3 = arith.constant 0 : index
    %2 = vector.load %arg2[%c0_2, %c0_3] : memref<32x96xbf16, #tpu.memory_space<vmem>>, vector<32x96xbf16>
    %cst = arith.constant dense<0.000000e+00> : vector<8x96xf32>
    %3 = tpu.matmul %1, %2, %cst {dimension_numbers = #tpu.dot_dimension_numbers<[1], [0], [0], [1], [0, 0, 1, 1], [], []>} : vector<8x32xbf16>, vector<32x96xbf16>, vector<8x96xf32> -> vector<8x96xf32>
    %4 = vector.extract_strided_slice %3 {offsets = [0, 0], sizes = [8, 32], strides = [1, 1]} : vector<8x96xf32> to vector<8x32xf32>
    %5 = arith.truncf %4 : vector<8x32xf32> to vector<8x32xbf16>
    %6 = vector.extract_strided_slice %3 {offsets = [0, 32], sizes = [8, 32], strides = [1, 1]} : vector<8x96xf32> to vector<8x32xf32>
    %7 = arith.truncf %6 : vector<8x32xf32> to vector<8x32xbf16>
    %8 = vector.extract_strided_slice %3 {offsets = [0, 64], sizes = [8, 32], strides = [1, 1]} : vector<8x96xf32> to vector<8x32xf32>
    %9 = arith.truncf %8 : vector<8x32xf32> to vector<8x32xbf16>
    %10 = vector.extract_strided_slice %5 {offsets = [0, 0], sizes = [8, 8], strides = [1, 1]} : vector<8x32xbf16> to vector<8x8xbf16>
    %11 = vector.shape_cast %10 : vector<8x8xbf16> to vector<1x8x8xbf16>
    %12 = vector.extract_strided_slice %7 {offsets = [0, 0], sizes = [8, 8], strides = [1, 1]} : vector<8x32xbf16> to vector<8x8xbf16>
    %13 = vector.shape_cast %12 : vector<8x8xbf16> to vector<1x8x8xbf16>
    %14 = vector.extract_strided_slice %9 {offsets = [0, 0], sizes = [8, 8], strides = [1, 1]} : vector<8x32xbf16> to vector<8x8xbf16>
    %15 = vector.shape_cast %14 : vector<8x8xbf16> to vector<1x8x8xbf16>
    "tpu.trace_start"() <{level = 10 : i32, message = "bqd,bkd->bqk"}> : () -> ()
    %cst_4 = arith.constant dense<0.000000e+00> : vector<1x8x8xf32>
    %16 = tpu.matmul %11, %13, %cst_4 {dimension_numbers = #tpu.dot_dimension_numbers<[2], [2], [1], [1], [0, 0, 0, 1, 1, 1], [0], [0]>} : vector<1x8x8xbf16>, vector<1x8x8xbf16>, vector<1x8x8xf32> -> vector<1x8x8xf32>
    "tpu.trace_stop"() : () -> ()
    %cst_5 = arith.constant dense<0xFF800000> : vector<1x8xf32>
    %17 = vector.multi_reduction <maximumf>, %16, %cst_5 [2] : vector<1x8x8xf32> to vector<1x8xf32>
    %18 = vector.shape_cast %17 : vector<1x8xf32> to vector<1x8x1xf32>
    %19 = vector.broadcast %18 : vector<1x8x1xf32> to vector<1x8x8xf32>
    %20 = arith.subf %16, %19 : vector<1x8x8xf32>
    %21 = math.exp %20 : vector<1x8x8xf32>
    %cst_6 = arith.constant dense<0.000000e+00> : vector<1x8xf32>
    %22 = vector.multi_reduction <add>, %21, %cst_6 [2] : vector<1x8x8xf32> to vector<1x8xf32>
    %23 = vector.shape_cast %22 : vector<1x8xf32> to vector<1x8x1xf32>
    %24 = tpu.reciprocal %23 {approx = true} : vector<1x8x1xf32> -> vector<1x8x1xf32>
    %25 = vector.broadcast %24 : vector<1x8x1xf32> to vector<1x8x8xf32>
    %26 = arith.mulf %21, %25 : vector<1x8x8xf32>
    %27 = arith.truncf %26 : vector<1x8x8xf32> to vector<1x8x8xbf16>
    "tpu.trace_start"() <{level = 10 : i32, message = "bqk,bkd->bqd"}> : () -> ()
    %cst_7 = arith.constant dense<0.000000e+00> : vector<1x8x8xf32>
    %28 = tpu.matmul %27, %15, %cst_7 {dimension_numbers = #tpu.dot_dimension_numbers<[2], [1], [1], [2], [0, 0, 0, 1, 1, 2], [0], [0]>} : vector<1x8x8xbf16>, vector<1x8x8xbf16>, vector<1x8x8xf32> -> vector<1x8x8xf32>
    "tpu.trace_stop"() : () -> ()
    %29 = arith.truncf %28 : vector<1x8x8xf32> to vector<1x8x8xbf16>
    %30 = vector.extract_strided_slice %5 {offsets = [0, 8], sizes = [8, 8], strides = [1, 1]} : vector<8x32xbf16> to vector<8x8xbf16>
    %31 = vector.shape_cast %30 : vector<8x8xbf16> to vector<1x8x8xbf16>
    %32 = vector.extract_strided_slice %7 {offsets = [0, 8], sizes = [8, 8], strides = [1, 1]} : vector<8x32xbf16> to vector<8x8xbf16>
    %33 = vector.shape_cast %32 : vector<8x8xbf16> to vector<1x8x8xbf16>
    %34 = vector.extract_strided_slice %9 {offsets = [0, 8], sizes = [8, 8], strides = [1, 1]} : vector<8x32xbf16> to vector<8x8xbf16>
    %35 = vector.shape_cast %34 : vector<8x8xbf16> to vector<1x8x8xbf16>
    "tpu.trace_start"() <{level = 10 : i32, message = "bqd,bkd->bqk"}> : () -> ()
    %cst_8 = arith.constant dense<0.000000e+00> : vector<1x8x8xf32>
    %36 = tpu.matmul %31, %33, %cst_8 {dimension_numbers = #tpu.dot_dimension_numbers<[2], [2], [1], [1], [0, 0, 0, 1, 1, 1], [0], [0]>} : vector<1x8x8xbf16>, vector<1x8x8xbf16>, vector<1x8x8xf32> -> vector<1x8x8xf32>
    "tpu.trace_stop"() : () -> ()
    %cst_9 = arith.constant dense<0xFF800000> : vector<1x8xf32>
    %37 = vector.multi_reduction <maximumf>, %36, %cst_9 [2] : vector<1x8x8xf32> to vector<1x8xf32>
    %38 = vector.shape_cast %37 : vector<1x8xf32> to vector<1x8x1xf32>
    %39 = vector.broadcast %38 : vector<1x8x1xf32> to vector<1x8x8xf32>
    %40 = arith.subf %36, %39 : vector<1x8x8xf32>
    %41 = math.exp %40 : vector<1x8x8xf32>
    %cst_10 = arith.constant dense<0.000000e+00> : vector<1x8xf32>
    %42 = vector.multi_reduction <add>, %41, %cst_10 [2] : vector<1x8x8xf32> to vector<1x8xf32>
    %43 = vector.shape_cast %42 : vector<1x8xf32> to vector<1x8x1xf32>
    %44 = tpu.reciprocal %43 {approx = true} : vector<1x8x1xf32> -> vector<1x8x1xf32>
    %45 = vector.broadcast %44 : vector<1x8x1xf32> to vector<1x8x8xf32>
    %46 = arith.mulf %41, %45 : vector<1x8x8xf32>
    %47 = arith.truncf %46 : vector<1x8x8xf32> to vector<1x8x8xbf16>
    "tpu.trace_start"() <{level = 10 : i32, message = "bqk,bkd->bqd"}> : () -> ()
    %cst_11 = arith.constant dense<0.000000e+00> : vector<1x8x8xf32>
    %48 = tpu.matmul %47, %35, %cst_11 {dimension_numbers = #tpu.dot_dimension_numbers<[2], [1], [1], [2], [0, 0, 0, 1, 1, 2], [0], [0]>} : vector<1x8x8xbf16>, vector<1x8x8xbf16>, vector<1x8x8xf32> -> vector<1x8x8xf32>
    "tpu.trace_stop"() : () -> ()
    %49 = arith.truncf %48 : vector<1x8x8xf32> to vector<1x8x8xbf16>
    %50 = vector.extract_strided_slice %5 {offsets = [0, 16], sizes = [8, 8], strides = [1, 1]} : vector<8x32xbf16> to vector<8x8xbf16>
    %51 = vector.shape_cast %50 : vector<8x8xbf16> to vector<1x8x8xbf16>
    %52 = vector.extract_strided_slice %7 {offsets = [0, 16], sizes = [8, 8], strides = [1, 1]} : vector<8x32xbf16> to vector<8x8xbf16>
    %53 = vector.shape_cast %52 : vector<8x8xbf16> to vector<1x8x8xbf16>
    %54 = vector.extract_strided_slice %9 {offsets = [0, 16], sizes = [8, 8], strides = [1, 1]} : vector<8x32xbf16> to vector<8x8xbf16>
    %55 = vector.shape_cast %54 : vector<8x8xbf16> to vector<1x8x8xbf16>
    "tpu.trace_start"() <{level = 10 : i32, message = "bqd,bkd->bqk"}> : () -> ()
    %cst_12 = arith.constant dense<0.000000e+00> : vector<1x8x8xf32>
    %56 = tpu.matmul %51, %53, %cst_12 {dimension_numbers = #tpu.dot_dimension_numbers<[2], [2], [1], [1], [0, 0, 0, 1, 1, 1], [0], [0]>} : vector<1x8x8xbf16>, vector<1x8x8xbf16>, vector<1x8x8xf32> -> vector<1x8x8xf32>
    "tpu.trace_stop"() : () -> ()
    %cst_13 = arith.constant dense<0xFF800000> : vector<1x8xf32>
    %57 = vector.multi_reduction <maximumf>, %56, %cst_13 [2] : vector<1x8x8xf32> to vector<1x8xf32>
    %58 = vector.shape_cast %57 : vector<1x8xf32> to vector<1x8x1xf32>
    %59 = vector.broadcast %58 : vector<1x8x1xf32> to vector<1x8x8xf32>
    %60 = arith.subf %56, %59 : vector<1x8x8xf32>
    %61 = math.exp %60 : vector<1x8x8xf32>
    %cst_14 = arith.constant dense<0.000000e+00> : vector<1x8xf32>
    %62 = vector.multi_reduction <add>, %61, %cst_14 [2] : vector<1x8x8xf32> to vector<1x8xf32>
    %63 = vector.shape_cast %62 : vector<1x8xf32> to vector<1x8x1xf32>
    %64 = tpu.reciprocal %63 {approx = true} : vector<1x8x1xf32> -> vector<1x8x1xf32>
    %65 = vector.broadcast %64 : vector<1x8x1xf32> to vector<1x8x8xf32>
    %66 = arith.mulf %61, %65 : vector<1x8x8xf32>
    %67 = arith.truncf %66 : vector<1x8x8xf32> to vector<1x8x8xbf16>
    "tpu.trace_start"() <{level = 10 : i32, message = "bqk,bkd->bqd"}> : () -> ()
    %cst_15 = arith.constant dense<0.000000e+00> : vector<1x8x8xf32>
    %68 = tpu.matmul %67, %55, %cst_15 {dimension_numbers = #tpu.dot_dimension_numbers<[2], [1], [1], [2], [0, 0, 0, 1, 1, 2], [0], [0]>} : vector<1x8x8xbf16>, vector<1x8x8xbf16>, vector<1x8x8xf32> -> vector<1x8x8xf32>
    "tpu.trace_stop"() : () -> ()
    %69 = arith.truncf %68 : vector<1x8x8xf32> to vector<1x8x8xbf16>
    %70 = vector.extract_strided_slice %5 {offsets = [0, 24], sizes = [8, 8], strides = [1, 1]} : vector<8x32xbf16> to vector<8x8xbf16>
    %71 = vector.shape_cast %70 : vector<8x8xbf16> to vector<1x8x8xbf16>
    %72 = vector.extract_strided_slice %7 {offsets = [0, 24], sizes = [8, 8], strides = [1, 1]} : vector<8x32xbf16> to vector<8x8xbf16>
    %73 = vector.shape_cast %72 : vector<8x8xbf16> to vector<1x8x8xbf16>
    %74 = vector.extract_strided_slice %9 {offsets = [0, 24], sizes = [8, 8], strides = [1, 1]} : vector<8x32xbf16> to vector<8x8xbf16>
    %75 = vector.shape_cast %74 : vector<8x8xbf16> to vector<1x8x8xbf16>
    "tpu.trace_start"() <{level = 10 : i32, message = "bqd,bkd->bqk"}> : () -> ()
    %cst_16 = arith.constant dense<0.000000e+00> : vector<1x8x8xf32>
    %76 = tpu.matmul %71, %73, %cst_16 {dimension_numbers = #tpu.dot_dimension_numbers<[2], [2], [1], [1], [0, 0, 0, 1, 1, 1], [0], [0]>} : vector<1x8x8xbf16>, vector<1x8x8xbf16>, vector<1x8x8xf32> -> vector<1x8x8xf32>
    "tpu.trace_stop"() : () -> ()
    %cst_17 = arith.constant dense<0xFF800000> : vector<1x8xf32>
    %77 = vector.multi_reduction <maximumf>, %76, %cst_17 [2] : vector<1x8x8xf32> to vector<1x8xf32>
    %78 = vector.shape_cast %77 : vector<1x8xf32> to vector<1x8x1xf32>
    %79 = vector.broadcast %78 : vector<1x8x1xf32> to vector<1x8x8xf32>
    %80 = arith.subf %76, %79 : vector<1x8x8xf32>
    %81 = math.exp %80 : vector<1x8x8xf32>
    %cst_18 = arith.constant dense<0.000000e+00> : vector<1x8xf32>
    %82 = vector.multi_reduction <add>, %81, %cst_18 [2] : vector<1x8x8xf32> to vector<1x8xf32>
    %83 = vector.shape_cast %82 : vector<1x8xf32> to vector<1x8x1xf32>
    %84 = tpu.reciprocal %83 {approx = true} : vector<1x8x1xf32> -> vector<1x8x1xf32>
    %85 = vector.broadcast %84 : vector<1x8x1xf32> to vector<1x8x8xf32>
    %86 = arith.mulf %81, %85 : vector<1x8x8xf32>
    %87 = arith.truncf %86 : vector<1x8x8xf32> to vector<1x8x8xbf16>
    "tpu.trace_start"() <{level = 10 : i32, message = "bqk,bkd->bqd"}> : () -> ()
    %cst_19 = arith.constant dense<0.000000e+00> : vector<1x8x8xf32>
    %88 = tpu.matmul %87, %75, %cst_19 {dimension_numbers = #tpu.dot_dimension_numbers<[2], [1], [1], [2], [0, 0, 0, 1, 1, 2], [0], [0]>} : vector<1x8x8xbf16>, vector<1x8x8xbf16>, vector<1x8x8xf32> -> vector<1x8x8xf32>
    "tpu.trace_stop"() : () -> ()
    %89 = arith.truncf %88 : vector<1x8x8xf32> to vector<1x8x8xbf16>
    %90 = tpu.concatenate %29, %49, %69, %89 in 2 : vector<1x8x8xbf16>, vector<1x8x8xbf16>, vector<1x8x8xbf16>, vector<1x8x8xbf16> -> vector<1x8x32xbf16>
    %91 = vector.shape_cast %90 : vector<1x8x32xbf16> to vector<8x32xbf16>
    %c0_20 = arith.constant 0 : index
    %c0_21 = arith.constant 0 : index
    %92 = vector.load %arg3[%c0_20, %c0_21] : memref<32x32xbf16, #tpu.memory_space<vmem>>, vector<32x32xbf16>
    %cst_22 = arith.constant dense<0.000000e+00> : vector<8x32xf32>
    %93 = tpu.matmul %91, %92, %cst_22 {dimension_numbers = #tpu.dot_dimension_numbers<[1], [0], [0], [1], [0, 0, 1, 1], [], []>} : vector<8x32xbf16>, vector<32x32xbf16>, vector<8x32xf32> -> vector<8x32xf32>
    %c0_23 = arith.constant 0 : index
    %c0_24 = arith.constant 0 : index
    %94 = vector.load %arg4[%c0_23, %c0_24] : memref<1x32xf32, #tpu.memory_space<vmem>>, vector<1x32xf32>
    %95 = vector.broadcast %94 : vector<1x32xf32> to vector<8x32xf32>
    %96 = arith.addf %93, %95 : vector<8x32xf32>
    %97 = vector.shape_cast %96 : vector<8x32xf32> to vector<1x8x32xf32>
    %c0_25 = arith.constant 0 : index
    %c0_26 = arith.constant 0 : index
    %c0_27 = arith.constant 0 : index
    %98 = vector.load %arg5[%c0_25, %c0_26, %c0_27] : memref<1x8x32xf32, #tpu.memory_space<vmem>>, vector<1x8x32xf32>
    tpu.vector_store %arg5[%c0_25, %c0_26, %c0_27], %97 {strides = array<i32>} : memref<1x8x32xf32, #tpu.memory_space<vmem>>, vector<1x8x32xf32>,
    return
  }
  func.func @transform_0(%arg0: i32) -> (i32, i32, i32) {
    %c0_i32 = arith.constant 0 : i32
    %c0_i32_0 = arith.constant 0 : i32
    %c0_i32_1 = arith.constant 0 : i32
    return %arg0, %c0_i32, %c0_i32_0 : i32, i32, i32
  }
  func.func @transform_1(%arg0: i32) -> (i32, i32) {
    %c0_i32 = arith.constant 0 : i32
    %c0_i32_0 = arith.constant 0 : i32
    %c0_i32_1 = arith.constant 0 : i32
    return %c0_i32, %c0_i32_0 : i32, i32
  }
  func.func @transform_2(%arg0: i32) -> (i32, i32) {
    %c0_i32 = arith.constant 0 : i32
    %c0_i32_0 = arith.constant 0 : i32
    %c0_i32_1 = arith.constant 0 : i32
    return %c0_i32, %c0_i32_0 : i32, i32
  }
  func.func @transform_3(%arg0: i32) -> (i32, i32) {
    %c0_i32 = arith.constant 0 : i32
    %c0_i32_0 = arith.constant 0 : i32
    %c0_i32_1 = arith.constant 0 : i32
    return %c0_i32, %c0_i32_0 : i32, i32
  }
  func.func @transform_4(%arg0: i32) -> (i32, i32, i32) {
    %c0_i32 = arith.constant 0 : i32
    %c0_i32_0 = arith.constant 0 : i32
    %c0_i32_1 = arith.constant 0 : i32
    return %arg0, %c0_i32, %c0_i32_0 : i32, i32, i32
  }
}

module attributes {stable_mosaic.version = 11 : i64} {
  func.func @_attention_kernel(%arg0: i32, %arg1: memref<1x8x32xbf16, #tpu.memory_space<vmem>>, %arg2: memref<32x96xbf16, #tpu.memory_space<vmem>>, %arg3: memref<32x32xbf16, #tpu.memory_space<vmem>>, %arg4: memref<1x32xf32, #tpu.memory_space<vmem>>, %arg5: memref<1x8x32xf32, #tpu.memory_space<vmem>>) attributes {dimension_semantics = [#tpu.dimension_semantics<parallel>], iteration_bounds = array<i64: 2>, scalar_prefetch = 0 : i64, scratch_operands = 0 : i64, tpu.core_type = #tpu.core_type<tc>, window_params = [{transform_indices = @transform_0, window_bounds = array<i64: 1, 8, 32>}, {pipeline_mode = #tpu.pipeline_mode<synchronous>, transform_indices = @transform_1, window_bounds = array<i64: 32, 96>}, {pipeline_mode = #tpu.pipeline_mode<synchronous>, transform_indices = @transform_2, window_bounds = array<i64: 32, 32>}, {pipeline_mode = #tpu.pipeline_mode<synchronous>, transform_indices = @transform_3, window_bounds = array<i64: 1, 32>}, {transform_indices = @transform_4, window_bounds = array<i64: 1, 8, 32>}]} {
    %c0 = arith.constant 0 : index
    %c0_0 = arith.constant 0 : index
    %c0_1 = arith.constant 0 : index
    %0 = vector.load %arg1[%c0, %c0_0, %c0_1] : memref<1x8x32xbf16, #tpu.memory_space<vmem>>, vector<1x8x32xbf16>
    %1 = vector.shape_cast %0 : vector<1x8x32xbf16> to vector<8x32xbf16>
    %c0_2 = arith.constant 0 : index
    %c0_3 = arith.constant 0 : index
    %2 = vector.load %arg2[%c0_2, %c0_3] : memref<32x96xbf16, #tpu.memory_space<vmem>>, vector<32x96xbf16>
    %cst = arith.constant dense<0.000000e+00> : vector<8x96xf32>
    %3 = tpu.matmul %1, %2, %cst {dimension_numbers = #tpu.dot_dimension_numbers<[1], [0], [0], [1], [0, 0, 1, 1], [], []>} : vector<8x32xbf16>, vector<32x96xbf16>, vector<8x96xf32> -> vector<8x96xf32>
    %4 = vector.extract_strided_slice %3 {offsets = [0, 0], sizes = [8, 32], strides = [1, 1]} : vector<8x96xf32> to vector<8x32xf32>
    %5 = arith.truncf %4 : vector<8x32xf32> to vector<8x32xbf16>
    %6 = vector.extract_strided_slice %3 {offsets = [0, 32], sizes = [8, 32], strides = [1, 1]} : vector<8x96xf32> to vector<8x32xf32>
    %7 = arith.truncf %6 : vector<8x32xf32> to vector<8x32xbf16>
    %8 = vector.extract_strided_slice %3 {offsets = [0, 64], sizes = [8, 32], strides = [1, 1]} : vector<8x96xf32> to vector<8x32xf32>
    %9 = arith.truncf %8 : vector<8x32xf32> to vector<8x32xbf16>
    %10 = vector.extract_strided_slice %5 {offsets = [0, 0], sizes = [8, 8], strides = [1, 1]} : vector<8x32xbf16> to vector<8x8xbf16>
    %11 = vector.shape_cast %10 : vector<8x8xbf16> to vector<1x8x8xbf16>
    %12 = vector.extract_strided_slice %7 {offsets = [0, 0], sizes = [8, 8], strides = [1, 1]} : vector<8x32xbf16> to vector<8x8xbf16>
    %13 = vector.shape_cast %12 : vector<8x8xbf16> to vector<1x8x8xbf16>
    %14 = vector.extract_strided_slice %9 {offsets = [0, 0], sizes = [8, 8], strides = [1, 1]} : vector<8x32xbf16> to vector<8x8xbf16>
    %15 = vector.shape_cast %14 : vector<8x8xbf16> to vector<1x8x8xbf16>
    "tpu.trace_start"() <{level = 10 : i32, message = "bqd,bkd->bqk"}> : () -> ()
    %cst_4 = arith.constant dense<0.000000e+00> : vector<1x8x8xf32>
    %16 = tpu.matmul %11, %13, %cst_4 {dimension_numbers = #tpu.dot_dimension_numbers<[2], [2], [1], [1], [0, 0, 0, 1, 1, 1], [0], [0]>} : vector<1x8x8xbf16>, vector<1x8x8xbf16>, vector<1x8x8xf32> -> vector<1x8x8xf32>
    "tpu.trace_stop"() : () -> ()
    %cst_5 = arith.constant dense<0xFF800000> : vector<1x8xf32>
    %17 = vector.multi_reduction <maximumf>, %16, %cst_5 [2] : vector<1x8x8xf32> to vector<1x8xf32>
    %18 = vector.shape_cast %17 : vector<1x8xf32> to vector<1x8x1xf32>
    %19 = vector.broadcast %18 : vector<1x8x1xf32> to vector<1x8x8xf32>
    %20 = arith.subf %16, %19 : vector<1x8x8xf32>
    %21 = math.exp %20 : vector<1x8x8xf32>
    %cst_6 = arith.constant dense<0.000000e+00> : vector<1x8xf32>
    %22 = vector.multi_reduction <add>, %21, %cst_6 [2] : vector<1x8x8xf32> to vector<1x8xf32>
    %23 = vector.shape_cast %22 : vector<1x8xf32> to vector<1x8x1xf32>
    %24 = tpu.reciprocal %23 {approx = true} : vector<1x8x1xf32> -> vector<1x8x1xf32>
    %25 = vector.broadcast %24 : vector<1x8x1xf32> to vector<1x8x8xf32>
    %26 = arith.mulf %21, %25 : vector<1x8x8xf32>
    %27 = arith.truncf %26 : vector<1x8x8xf32> to vector<1x8x8xbf16>
    "tpu.trace_start"() <{level = 10 : i32, message = "bqk,bkd->bqd"}> : () -> ()
    %cst_7 = arith.constant dense<0.000000e+00> : vector<1x8x8xf32>
    %28 = tpu.matmul %27, %15, %cst_7 {dimension_numbers = #tpu.dot_dimension_numbers<[2], [1], [1], [2], [0, 0, 0, 1, 1, 2], [0], [0]>} : vector<1x8x8xbf16>, vector<1x8x8xbf16>, vector<1x8x8xf32> -> vector<1x8x8xf32>
    "tpu.trace_stop"() : () -> ()
    %29 = arith.truncf %28 : vector<1x8x8xf32> to vector<1x8x8xbf16>
    %30 = vector.extract_strided_slice %5 {offsets = [0, 8], sizes = [8, 8], strides = [1, 1]} : vector<8x32xbf16> to vector<8x8xbf16>
    %31 = vector.shape_cast %30 : vector<8x8xbf16> to vector<1x8x8xbf16>
    %32 = vector.extract_strided_slice %7 {offsets = [0, 8], sizes = [8, 8], strides = [1, 1]} : vector<8x32xbf16> to vector<8x8xbf16>
    %33 = vector.shape_cast %32 : vector<8x8xbf16> to vector<1x8x8xbf16>
    %34 = vector.extract_strided_slice %9 {offsets = [0, 8], sizes = [8, 8], strides = [1, 1]} : vector<8x32xbf16> to vector<8x8xbf16>
    %35 = vector.shape_cast %34 : vector<8x8xbf16> to vector<1x8x8xbf16>
    "tpu.trace_start"() <{level = 10 : i32, message = "bqd,bkd->bqk"}> : () -> ()
    %cst_8 = arith.constant dense<0.000000e+00> : vector<1x8x8xf32>
    %36 = tpu.matmul %31, %33, %cst_8 {dimension_numbers = #tpu.dot_dimension_numbers<[2], [2], [1], [1], [0, 0, 0, 1, 1, 1], [0], [0]>} : vector<1x8x8xbf16>, vector<1x8x8xbf16>, vector<1x8x8xf32> -> vector<1x8x8xf32>
    "tpu.trace_stop"() : () -> ()
    %cst_9 = arith.constant dense<0xFF800000> : vector<1x8xf32>
    %37 = vector.multi_reduction <maximumf>, %36, %cst_9 [2] : vector<1x8x8xf32> to vector<1x8xf32>
    %38 = vector.shape_cast %37 : vector<1x8xf32> to vector<1x8x1xf32>
    %39 = vector.broadcast %38 : vector<1x8x1xf32> to vector<1x8x8xf32>
    %40 = arith.subf %36, %39 : vector<1x8x8xf32>
    %41 = math.exp %40 : vector<1x8x8xf32>
    %cst_10 = arith.constant dense<0.000000e+00> : vector<1x8xf32>
    %42 = vector.multi_reduction <add>, %41, %cst_10 [2] : vector<1x8x8xf32> to vector<1x8xf32>
    %43 = vector.shape_cast %42 : vector<1x8xf32> to vector<1x8x1xf32>
    %44 = tpu.reciprocal %43 {approx = true} : vector<1x8x1xf32> -> vector<1x8x1xf32>
    %45 = vector.broadcast %44 : vector<1x8x1xf32> to vector<1x8x8xf32>
    %46 = arith.mulf %41, %45 : vector<1x8x8xf32>
    %47 = arith.truncf %46 : vector<1x8x8xf32> to vector<1x8x8xbf16>
    "tpu.trace_start"() <{level = 10 : i32, message = "bqk,bkd->bqd"}> : () -> ()
    %cst_11 = arith.constant dense<0.000000e+00> : vector<1x8x8xf32>
    %48 = tpu.matmul %47, %35, %cst_11 {dimension_numbers = #tpu.dot_dimension_numbers<[2], [1], [1], [2], [0, 0, 0, 1, 1, 2], [0], [0]>} : vector<1x8x8xbf16>, vector<1x8x8xbf16>, vector<1x8x8xf32> -> vector<1x8x8xf32>
    "tpu.trace_stop"() : () -> ()
    %49 = arith.truncf %48 : vector<1x8x8xf32> to vector<1x8x8xbf16>
    %50 = vector.extract_strided_slice %5 {offsets = [0, 16], sizes = [8, 8], strides = [1, 1]} : vector<8x32xbf16> to vector<8x8xbf16>
    %51 = vector.shape_cast %50 : vector<8x8xbf16> to vector<1x8x8xbf16>
    %52 = vector.extract_strided_slice %7 {offsets = [0, 16], sizes = [8, 8], strides = [1, 1]} : vector<8x32xbf16> to vector<8x8xbf16>
    %53 = vector.shape_cast %52 : vector<8x8xbf16> to vector<1x8x8xbf16>
    %54 = vector.extract_strided_slice %9 {offsets = [0, 16], sizes = [8, 8], strides = [1, 1]} : vector<8x32xbf16> to vector<8x8xbf16>
    %55 = vector.shape_cast %54 : vector<8x8xbf16> to vector<1x8x8xbf16>
    "tpu.trace_start"() <{level = 10 : i32, message = "bqd,bkd->bqk"}> : () -> ()
    %cst_12 = arith.constant dense<0.000000e+00> : vector<1x8x8xf32>
    %56 = tpu.matmul %51, %53, %cst_12 {dimension_numbers = #tpu.dot_dimension_numbers<[2], [2], [1], [1], [0, 0, 0, 1, 1, 1], [0], [0]>} : vector<1x8x8xbf16>, vector<1x8x8xbf16>, vector<1x8x8xf32> -> vector<1x8x8xf32>
    "tpu.trace_stop"() : () -> ()
    %cst_13 = arith.constant dense<0xFF800000> : vector<1x8xf32>
    %57 = vector.multi_reduction <maximumf>, %56, %cst_13 [2] : vector<1x8x8xf32> to vector<1x8xf32>
    %58 = vector.shape_cast %57 : vector<1x8xf32> to vector<1x8x1xf32>
    %59 = vector.broadcast %58 : vector<1x8x1xf32> to vector<1x8x8xf32>
    %60 = arith.subf %56, %59 : vector<1x8x8xf32>
    %61 = math.exp %60 : vector<1x8x8xf32>
    %cst_14 = arith.constant dense<0.000000e+00> : vector<1x8xf32>
    %62 = vector.multi_reduction <add>, %61, %cst_14 [2] : vector<1x8x8xf32> to vector<1x8xf32>
    %63 = vector.shape_cast %62 : vector<1x8xf32> to vector<1x8x1xf32>
    %64 = tpu.reciprocal %63 {approx = true} : vector<1x8x1xf32> -> vector<1x8x1xf32>
    %65 = vector.broadcast %64 : vector<1x8x1xf32> to vector<1x8x8xf32>
    %66 = arith.mulf %61, %65 : vector<1x8x8xf32>
    %67 = arith.truncf %66 : vector<1x8x8xf32> to vector<1x8x8xbf16>
    "tpu.trace_start"() <{level = 10 : i32, message = "bqk,bkd->bqd"}> : () -> ()
    %cst_15 = arith.constant dense<0.000000e+00> : vector<1x8x8xf32>
    %68 = tpu.matmul %67, %55, %cst_15 {dimension_numbers = #tpu.dot_dimension_numbers<[2], [1], [1], [2], [0, 0, 0, 1, 1, 2], [0], [0]>} : vector<1x8x8xbf16>, vector<1x8x8xbf16>, vector<1x8x8xf32> -> vector<1x8x8xf32>
    "tpu.trace_stop"() : () -> ()
    %69 = arith.truncf %68 : vector<1x8x8xf32> to vector<1x8x8xbf16>
    %70 = vector.extract_strided_slice %5 {offsets = [0, 24], sizes = [8, 8], strides = [1, 1]} : vector<8x32xbf16> to vector<8x8xbf16>
    %71 = vector.shape_cast %70 : vector<8x8xbf16> to vector<1x8x8xbf16>
    %72 = vector.extract_strided_slice %7 {offsets = [0, 24], sizes = [8, 8], strides = [1, 1]} : vector<8x32xbf16> to vector<8x8xbf16>
    %73 = vector.shape_cast %72 : vector<8x8xbf16> to vector<1x8x8xbf16>
    %74 = vector.extract_strided_slice %9 {offsets = [0, 24], sizes = [8, 8], strides = [1, 1]} : vector<8x32xbf16> to vector<8x8xbf16>
    %75 = vector.shape_cast %74 : vector<8x8xbf16> to vector<1x8x8xbf16>
    "tpu.trace_start"() <{level = 10 : i32, message = "bqd,bkd->bqk"}> : () -> ()
    %cst_16 = arith.constant dense<0.000000e+00> : vector<1x8x8xf32>
    %76 = tpu.matmul %71, %73, %cst_16 {dimension_numbers = #tpu.dot_dimension_numbers<[2], [2], [1], [1], [0, 0, 0, 1, 1, 1], [0], [0]>} : vector<1x8x8xbf16>, vector<1x8x8xbf16>, vector<1x8x8xf32> -> vector<1x8x8xf32>
    "tpu.trace_stop"() : () -> ()
    %cst_17 = arith.constant dense<0xFF800000> : vector<1x8xf32>
    %77 = vector.multi_reduction <maximumf>, %76, %cst_17 [2] : vector<1x8x8xf32> to vector<1x8xf32>
    %78 = vector.shape_cast %77 : vector<1x8xf32> to vector<1x8x1xf32>
    %79 = vector.broadcast %78 : vector<1x8x1xf32> to vector<1x8x8xf32>
    %80 = arith.subf %76, %79 : vector<1x8x8xf32>
    %81 = math.exp %80 : vector<1x8x8xf32>
    %cst_18 = arith.constant dense<0.000000e+00> : vector<1x8xf32>
    %82 = vector.multi_reduction <add>, %81, %cst_18 [2] : vector<1x8x8xf32> to vector<1x8xf32>
    %83 = vector.shape_cast %82 : vector<1x8xf32> to vector<1x8x1xf32>
    %84 = tpu.reciprocal %83 {approx = true} : vector<1x8x1xf32> -> vector<1x8x1xf32>
    %85 = vector.broadcast %84 : vector<1x8x1xf32> to vector<1x8x8xf32>
    %86 = arith.mulf %81, %85 : vector<1x8x8xf32>
    %87 = arith.truncf %86 : vector<1x8x8xf32> to vector<1x8x8xbf16>
    "tpu.trace_start"() <{level = 10 : i32, message = "bqk,bkd->bqd"}> : () -> ()
    %cst_19 = arith.constant dense<0.000000e+00> : vector<1x8x8xf32>
    %88 = tpu.matmul %87, %75, %cst_19 {dimension_numbers = #tpu.dot_dimension_numbers<[2], [1], [1], [2], [0, 0, 0, 1, 1, 2], [0], [0]>} : vector<1x8x8xbf16>, vector<1x8x8xbf16>, vector<1x8x8xf32> -> vector<1x8x8xf32>
    "tpu.trace_stop"() : () -> ()
    %89 = arith.truncf %88 : vector<1x8x8xf32> to vector<1x8x8xbf16>
    %90 = tpu.concatenate %29, %49, %69, %89 in 2 : vector<1x8x8xbf16>, vector<1x8x8xbf16>, vector<1x8x8xbf16>, vector<1x8x8xbf16> -> vector<1x8x32xbf16>
    %91 = vector.shape_cast %90 : vector<1x8x32xbf16> to vector<8x32xbf16>
    %c0_20 = arith.constant 0 : index
    %c0_21 = arith.constant 0 : index
    %92 = vector.load %arg3[%c0_20, %c0_21] : memref<32x32xbf16, #tpu.memory_space<vmem>>, vector<32x32xbf16>
    %cst_22 = arith.constant dense<0.000000e+00> : vector<8x32xf32>
    %93 = tpu.matmul %91, %92, %cst_22 {dimension_numbers = #tpu.dot_dimension_numbers<[1], [0], [0], [1], [0, 0, 1, 1], [], []>} : vector<8x32xbf16>, vector<32x32xbf16>, vector<8x32xf32> -> vector<8x32xf32>
    %c0_23 = arith.constant 0 : index
    %c0_24 = arith.constant 0 : index
    %94 = vector.load %arg4[%c0_23, %c0_24] : memref<1x32xf32, #tpu.memory_space<vmem>>, vector<1x32xf32>
    %95 = vector.broadcast %94 : vector<1x32xf32> to vector<8x32xf32>
    %96 = arith.addf %93, %95 : vector<8x32xf32>
    %97 = vector.shape_cast %96 : vector<8x32xf32> to vector<1x8x32xf32>
    %c0_25 = arith.constant 0 : index
    %c0_26 = arith.constant 0 : index
    %c0_27 = arith.constant 0 : index
    %98 = vector.load %arg5[%c0_25, %c0_26, %c0_27] : memref<1x8x32xf32, #tpu.memory_space<vmem>>, vector<1x8x32xf32>
    tpu.vector_store %arg5[%c0_25, %c0_26, %c0_27], %97 {strides = array<i32>} : memref<1x8x32xf32, #tpu.memory_space<vmem>>, vector<1x8x32xf32>,
    return
  }
  func.func @transform_0(%arg0: i32) -> (i32, i32, i32) {
    %c0_i32 = arith.constant 0 : i32
    %c0_i32_0 = arith.constant 0 : i32
    %c0_i32_1 = arith.constant 0 : i32
    return %arg0, %c0_i32, %c0_i32_0 : i32, i32, i32
  }
  func.func @transform_1(%arg0: i32) -> (i32, i32) {
    %c0_i32 = arith.constant 0 : i32
    %c0_i32_0 = arith.constant 0 : i32
    %c0_i32_1 = arith.constant 0 : i32
    return %c0_i32, %c0_i32_0 : i32, i32
  }
  func.func @transform_2(%arg0: i32) -> (i32, i32) {
    %c0_i32 = arith.constant 0 : i32
    %c0_i32_0 = arith.constant 0 : i32
    %c0_i32_1 = arith.constant 0 : i32
    return %c0_i32, %c0_i32_0 : i32, i32
  }
  func.func @transform_3(%arg0: i32) -> (i32, i32) {
    %c0_i32 = arith.constant 0 : i32
    %c0_i32_0 = arith.constant 0 : i32
    %c0_i32_1 = arith.constant 0 : i32
    return %c0_i32, %c0_i32_0 : i32, i32
  }
  func.func @transform_4(%arg0: i32) -> (i32, i32, i32) {
    %c0_i32 = arith.constant 0 : i32
    %c0_i32_0 = arith.constant 0 : i32
    %c0_i32_1 = arith.constant 0 : i32
    return %arg0, %c0_i32, %c0_i32_0 : i32, i32, i32
  }
}

</mosaic_0001>

<llo_original>
// kernel: tpu_custom_call.1
$region0: #{tpu_custom_call.1}
  #allocation0 [shape = 'u32[]', space=smem, size = 0x4, offset = 0x4, fixed_abs, tag = 'smem constant byte address 0x4 - core index']
  #allocation1 [shape = 'u32[144,128]{1,0:T(1,128)}', space=vmem, size = 0x12000, scoped, tag = 'internal scratch']
  %s0 = inlined_call_operand.hbm [shape: bf16[2,8,32], index: 0, kind: input, shape index: {}]
  %s1 = inlined_call_operand.hbm [shape: bf16[32,96], index: 1, kind: input, shape index: {}]
  %s2 = inlined_call_operand.hbm [shape: bf16[32,32], index: 2, kind: input, shape index: {}]
  %s3 = inlined_call_operand.hbm [shape: f32[1,32], index: 3, kind: input, shape index: {}]
  %s4 = inlined_call_operand.hbm [shape: f32[2,8,32], index: 4, kind: output, shape index: {}]
  %s5 = sld [smem:[#allocation0]]
  $region65: #{tpu_custom_call.1} parent=0
    _
  %s7 = ssub.s32 1, %s5
  %s8 = scalar_select 0, %s7, %s5
  $region1: #{tpu_custom_call.1} parent=0
    #allocation2 [shape = 'u8[4096]{0}', space=vmem, size = 0x1000, scoped, tag = 'input window, operand 0']
    #allocation3 [shape = 's32[2]{0}', space=sflag, size = 0x8, scoped, tag = 'scoped memory for tpu_custom_call.1']
    #allocation4 [shape = 's32[2]{0}', space=sflag, size = 0x8, scoped, tag = 'scoped memory for tpu_custom_call.1']
    #allocation5 [shape = 'u8[8192]{0}', space=vmem, size = 0x2000, scoped, tag = 'input window, operand 1, single buffered']
    #allocation6 [shape = 's32[1]{0}', space=sflag, size = 0x4, scoped, tag = 'scoped memory for tpu_custom_call.1']
    #allocation7 [shape = 'u8[8192]{0}', space=vmem, size = 0x2000, scoped, tag = 'input window, operand 2, single buffered']
    #allocation8 [shape = 'u8[512]{0}', space=vmem, size = 0x400, scoped, tag = 'input window, operand 3, single buffered']
    #allocation9 [shape = 's32[1]{0}', space=sflag, size = 0x4, scoped, tag = 'scoped memory for tpu_custom_call.1']
    #allocation10 [shape = 'u8[8192]{0}', space=vmem, size = 0x2000, scoped, tag = 'output window, operand 0']
    %9 = vsyncpa [#allocation3], 0
    %s10 = scalar_lea.sflag [#allocation3], 1
    %11 = vsyncpa %s10, 0
    %12 = vsyncpa [#allocation6], 0
    %13 = vsyncpa [#allocation9], 0
    %14 = vsyncpa [#allocation4], 0
    %s15 = scalar_lea.sflag [#allocation4], 1
    %16 = vsyncpa %s15, 0
    loop: start=0, step=1, limit=4
    $region2: #{tpu_custom_call.1} parent=1 // loop_pre_header
      _
    $region3: #{tpu_custom_call.1} parent=1 // loop_header
      %s18 = sphi 0, %s22
      %p19 = scmp.ge.s32.totalorder %s18, 4
      %s28 = sphi 0, %s30
      %s31 = sphi 0, %s28
      %s32 = sphi 0, %s31
      %s48 = sphi 0, %s32
      %s52 = sphi 0, %s52
      %s54 = sphi 0, %s52
      %s55 = sphi 0, %s54
      %s69 = sphi 0, %s55
      %s73 = sphi 0, %s73
      %s75 = sphi 0, %s73
      %s76 = sphi 0, %s75
      %s90 = sphi 0, %s76
      %s94 = sphi 0, %s94
      %s96 = sphi 0, %s94
      %s97 = sphi 0, %s96
      %s111 = sphi 0, %s97
      %s117 = sphi 0, %s119
      %s120 = sphi 0, %s117
      %s121 = sphi 0, %s120
      %s137 = sphi 0, %s121
    $region4: #{tpu_custom_call.1} parent=1 // loop_header_branch
      %21 = sbr.rel (%p19) target = $region8
    $region5: #{tpu_custom_call.1} parent=1 // loop_body
      %s23 = ssub.s32 %s18, 1
      %s24 = ssub.s32 %s18, 2
      %s25 = sadd.s32 %s18, 1
      %s26 = ssub.s32 %s18, %s25
      %p27 = scmp.eq.s32.totalorder %s26, 0
      %s29 = sadd.s32 %s28, 1
      %s30 = scalar_select %p27, %s28, %s29
      %p33 = pneg %p27
      %p34 = scmp.eq.s32.totalorder %s18, 1
      %p35 = por %p33, %p34
      %p36 = scmp.ne.s32.totalorder %s28, %s31
      %p37 = scmp.eq.s32.totalorder %s18, 0
      %p38 = por %p36, %p37
      %p39 = scmp.ne.s32.totalorder %s28, %s31
      %p40 = scmp.eq.s32.totalorder %s23, 1
      %p41 = por %p39, %p40
      %p42 = scmp.ne.s32.totalorder %s31, %s32
      %p43 = scmp.eq.s32.totalorder %s23, 0
      %p44 = por %p42, %p43
      %p45 = scmp.ne.s32.totalorder %s31, %s32
      %p46 = scmp.eq.s32.totalorder %s24, 1
      %p47 = por %p45, %p46
      %p49 = scmp.ne.s32.totalorder %s32, %s48
      %p50 = scmp.eq.s32.totalorder %s24, 0
      %p51 = por %p49, %p50
      %s53 = sadd.s32 %s52, 1
      %p56 = scmp.eq.s32.totalorder %s18, 1
      %p57 = scmp.ne.s32.totalorder %s52, %s54
      %p58 = scmp.eq.s32.totalorder %s18, 0
      %p59 = por %p57, %p58
      %p60 = scmp.ne.s32.totalorder %s52, %s54
      %p61 = scmp.eq.s32.totalorder %s23, 1
      %p62 = por %p60, %p61
      %p63 = scmp.ne.s32.totalorder %s54, %s55
      %p64 = scmp.eq.s32.totalorder %s23, 0
      %p65 = por %p63, %p64
      %p66 = scmp.ne.s32.totalorder %s54, %s55
      %p67 = scmp.eq.s32.totalorder %s24, 1
      %p68 = por %p66, %p67
      %p70 = scmp.ne.s32.totalorder %s55, %s69
      %p71 = scmp.eq.s32.totalorder %s24, 0
      %p72 = por %p70, %p71
      %s74 = sadd.s32 %s73, 1
      %p77 = scmp.eq.s32.totalorder %s18, 1
      %p78 = scmp.ne.s32.totalorder %s73, %s75
      %p79 = scmp.eq.s32.totalorder %s18, 0
      %p80 = por %p78, %p79
      %p81 = scmp.ne.s32.totalorder %s73, %s75
      %p82 = scmp.eq.s32.totalorder %s23, 1
      %p83 = por %p81, %p82
      %p84 = scmp.ne.s32.totalorder %s75, %s76
      %p85 = scmp.eq.s32.totalorder %s23, 0
      %p86 = por %p84, %p85
      %p87 = scmp.ne.s32.totalorder %s75, %s76
      %p88 = scmp.eq.s32.totalorder %s24, 1
      %p89 = por %p87, %p88
      %p91 = scmp.ne.s32.totalorder %s76, %s90
      %p92 = scmp.eq.s32.totalorder %s24, 0
      %p93 = por %p91, %p92
      %s95 = sadd.s32 %s94, 1
      %p98 = scmp.eq.s32.totalorder %s18, 1
      %p99 = scmp.ne.s32.totalorder %s94, %s96
      %p100 = scmp.eq.s32.totalorder %s18, 0
      %p101 = por %p99, %p100
      %p102 = scmp.ne.s32.totalorder %s94, %s96
      %p103 = scmp.eq.s32.totalorder %s23, 1
      %p104 = por %p102, %p103
      %p105 = scmp.ne.s32.totalorder %s96, %s97
      %p106 = scmp.eq.s32.totalorder %s23, 0
      %p107 = por %p105, %p106
      %p108 = scmp.ne.s32.totalorder %s96, %s97
      %p109 = scmp.eq.s32.totalorder %s24, 1
      %p110 = por %p108, %p109
      %p112 = scmp.ne.s32.totalorder %s97, %s111
      %p113 = scmp.eq.s32.totalorder %s24, 0
      %p114 = por %p112, %p113
      %s115 = ssub.s32 %s18, %s25
      %p116 = scmp.eq.s32.totalorder %s115, 0
      %s118 = sadd.s32 %s117, 1
      %s119 = scalar_select %p116, %s117, %s118
      %p122 = pneg %p116
      %p123 = scmp.eq.s32.totalorder %s18, 1
      %p124 = por %p122, %p123
      %p125 = scmp.ne.s32.totalorder %s117, %s120
      %p126 = scmp.eq.s32.totalorder %s18, 0
      %p127 = por %p125, %p126
      %p128 = scmp.ne.s32.totalorder %s117, %s120
      %p129 = scmp.eq.s32.totalorder %s23, 1
      %p130 = por %p128, %p129
      %p131 = scmp.ne.s32.totalorder %s120, %s121
      %p132 = scmp.eq.s32.totalorder %s23, 0
      %p133 = por %p131, %p132
      %p134 = scmp.ne.s32.totalorder %s120, %s121
      %p135 = scmp.eq.s32.totalorder %s24, 1
      %p136 = por %p134, %p135
      %p138 = scmp.ne.s32.totalorder %s121, %s137
      %p139 = scmp.eq.s32.totalorder %s24, 0
      %p140 = por %p138, %p139
      %p141 = scmp.le.s32.totalorder 1, %s18
      %p142 = scmp.lt.s32.totalorder %s18, 3
      %p143 = pnand %p141, %p142
      %p144 = pneg %p143
      // Predicated region
      $region9: #{tpu_custom_call.1} parent=5 // pred_check
        _
      $region10: #{tpu_custom_call.1} parent=5 // pred_check_branch
        %146 = sbr.rel (%p143) target = $region12
      $region11: #{tpu_custom_call.1} parent=5 // pred_region
        %s147 = ssub.s32 %s18, 1
        // Predicated region
        $region13: #{tpu_custom_call.1} parent=11 // pred_check
          %p148 = pneg %p65
        $region14: #{tpu_custom_call.1} parent=11 // pred_check_branch
          %150 = sbr.rel (%p148) target = $region16
        $region15: #{tpu_custom_call.1} parent=11 // pred_region
          %s152 = ssub.s32 256, 256
          %153 = vsyncadd [#allocation6], %s152
          %s154 = sshll.u32 [#allocation5], 4
          %s155 = int_to_ptr.vmem [resolvable:$true] %s154
          %160 = dma.hbm_to_vmem [thread:$0]  %s1, 256, %s155, [#allocation6], 64, 64, 4
        $region16: #{tpu_custom_call.1} parent=11 // pred_fallthru
          _
        // Predicated region
        $region17: #{tpu_custom_call.1} parent=11 // pred_check
          %p161 = pneg %p86
        $region18: #{tpu_custom_call.1} parent=11 // pred_check_branch
          %163 = sbr.rel (%p161) target = $region20
        $region19: #{tpu_custom_call.1} parent=11 // pred_region
          %s165 = ssub.s32 256, 256
          %166 = vsyncadd [#allocation6], %s165
          %s167 = sshll.u32 [#allocation7], 4
          %s168 = int_to_ptr.vmem [resolvable:$true] %s167
          %173 = dma.hbm_to_vmem [thread:$0]  %s2, 256, %s168, [#allocation6], 64, 64, 4
        $region20: #{tpu_custom_call.1} parent=11 // pred_fallthru
          _
        // Predicated region
        $region21: #{tpu_custom_call.1} parent=11 // pred_check
          %p174 = pneg %p107
        $region22: #{tpu_custom_call.1} parent=11 // pred_check_branch
          %176 = sbr.rel (%p174) target = $region24
        $region23: #{tpu_custom_call.1} parent=11 // pred_region
          %s178 = ssub.s32 16, 16
          %179 = vsyncadd [#allocation9], %s178
          %s181 = sshll.u32 [#allocation8], 4
          %s182 = int_to_ptr.vmem [resolvable:$true] %s181
          %184 = dma.hbm_to_vmem [thread:$0]  %s3, 16, %s182, [#allocation9]
        $region24: #{tpu_custom_call.1} parent=11 // pred_fallthru
          _
      $region12: #{tpu_custom_call.1} parent=5 // pred_fallthru
        _
      %p185 = scmp.lt.s32.totalorder %s18, 2
      // Predicated region
      $region25: #{tpu_custom_call.1} parent=5 // pred_check
        %p186 = pneg %p185
      $region26: #{tpu_custom_call.1} parent=5 // pred_check_branch
        %188 = sbr.rel (%p186) target = $region28
      $region27: #{tpu_custom_call.1} parent=5 // pred_region
        // Predicated region
        $region29: #{tpu_custom_call.1} parent=27 // pred_check
          %p189 = pneg %p38
        $region30: #{tpu_custom_call.1} parent=27 // pred_check_branch
          %191 = sbr.rel (%p189) target = $region32
        $region31: #{tpu_custom_call.1} parent=27 // pred_region
          %s192 = sand.u32 %s28, 1
          %s193 = scalar_lea.sflag [#allocation3], %s192
          %s194 = sand.u32 %s28, 1
          %s195 = smul.addr %s194, 4
          %s196 = scalar_lea.vmem [#allocation2], %s195
          %s198 = ssub.s32 64, 64
          %199 = vsyncadd %s193, %s198
          %s200 = smul.addr %s18, 64
          %s201 = scalar_lea.hbm %s0, %s200
          %s203 = sshll.u32 %s196, 4
          %s204 = int_to_ptr.vmem [resolvable:$true] %s203
          %206 = dma.hbm_to_vmem [thread:$0]  %s201, 64, %s204, %s193
        $region32: #{tpu_custom_call.1} parent=27 // pred_fallthru
          _
      $region28: #{tpu_custom_call.1} parent=5 // pred_fallthru
        _
      %p207 = scmp.le.s32.totalorder 1, %s18
      %p208 = scmp.lt.s32.totalorder %s18, 3
      %p209 = pnand %p207, %p208
      %p210 = pneg %p209
      // Predicated region
      $region33: #{tpu_custom_call.1} parent=5 // pred_check
        _
      $region34: #{tpu_custom_call.1} parent=5 // pred_check_branch
        %212 = sbr.rel (%p209) target = $region36
      $region35: #{tpu_custom_call.1} parent=5 // pred_region
        %s213 = ssub.s32 %s18, 1
        %s214 = sand.u32 %s31, 1
        %s215 = scalar_lea.sflag [#allocation3], %s214
        %s216 = sand.u32 %s31, 1
        %s217 = smul.addr %s216, 4
        %s218 = scalar_lea.vmem [#allocation2], %s217
        // Predicated region
        $region37: #{tpu_custom_call.1} parent=35 // pred_check
          %p219 = pneg %p44
        $region38: #{tpu_custom_call.1} parent=35 // pred_check_branch
          %221 = sbr.rel (%p219) target = $region40
        $region39: #{tpu_custom_call.1} parent=35 // pred_region
          %222 = dma.done %s215, 64
        $region40: #{tpu_custom_call.1} parent=35 // pred_fallthru
          _
        // Predicated region
        $region41: #{tpu_custom_call.1} parent=35 // pred_check
          %p223 = pneg %p65
        $region42: #{tpu_custom_call.1} parent=35 // pred_check_branch
          %225 = sbr.rel (%p223) target = $region44
        $region43: #{tpu_custom_call.1} parent=35 // pred_region
          %226 = dma.done [#allocation6], 256
        $region44: #{tpu_custom_call.1} parent=35 // pred_fallthru
          _
        // Predicated region
        $region45: #{tpu_custom_call.1} parent=35 // pred_check
          %p227 = pneg %p86
        $region46: #{tpu_custom_call.1} parent=35 // pred_check_branch
          %229 = sbr.rel (%p227) target = $region48
        $region47: #{tpu_custom_call.1} parent=35 // pred_region
          %230 = dma.done [#allocation6], 256
        $region48: #{tpu_custom_call.1} parent=35 // pred_fallthru
          _
        // Predicated region
        $region49: #{tpu_custom_call.1} parent=35 // pred_check
          %p231 = pneg %p107
        $region50: #{tpu_custom_call.1} parent=35 // pred_check_branch
          %233 = sbr.rel (%p231) target = $region52
        $region51: #{tpu_custom_call.1} parent=35 // pred_region
          %234 = dma.done [#allocation9], 16
        $region52: #{tpu_custom_call.1} parent=35 // pred_fallthru
          _
        %s235 = sand.u32 %s31, 1
        %s236 = scalar_lea.sflag [#allocation3], %s235
        %s237 = sand.u32 %s31, 1
        %s238 = smul.addr %s237, 4
        %s239 = scalar_lea.vmem [#allocation2], %s238
        %p240 = pneg %p44
        %p241 = pneg %p41
        %p242 = pneg %p65
        %p243 = pneg %p62
        %p244 = pneg %p86
        %p245 = pneg %p83
        %p246 = pneg %p107
        %p247 = pneg %p104
        %p248 = pneg %p133
        %p249 = pneg %p130
        %s250 = sand.u32 %s120, 1
        %s251 = scalar_lea.sflag [#allocation4], %s250
        %s252 = sand.u32 %s120, 1
        %s253 = smul.addr %s252, 8
        %s254 = scalar_lea.vmem [#allocation10], %s253
        %v256 = vld [vmem:[%s218] sm:$0xf]
        %v257 = vld [vmem:[#allocation5] sm:$0xf]
        %v258 = vld [vmem:[#allocation5 + $0x4] sm:$0xf]
        %v259 = vld [vmem:[#allocation5 + $0x8] sm:$0xf]
        %v260 = vld [vmem:[#allocation5 + $0xc] sm:$0xf]
        %v265 = vunpack.c.l.b16 %v257
        %v266 = vunpack.c.l.b16 %v258
        %v267 = vunpack.c.l.b16 %v259
        %v268 = vunpack.c.l.b16 %v260
        %v269 = vpack.c.b16 %v266, %v265
        %v270 = vpack.c.b16 %v268, %v267
        %vm273 = vcmask 261120
        %v275 = vsel %vm273, %v256, 0
        %277 = vmatprep.subr.bf16.mxu0 0
        %278 = vmatpush1.bf16.msra.mxu0 %v269
        %279 = vmatprep.subr.bf16.mxu0 0
        %280 = vmatpush1.bf16.msra.mxu0 %v270
        %281 = vmatprep.subr.bf16.mxu0 0
        %282 = vmatpush1.bf16.msra.mxu0 0
        %283 = vmatprep.subr.bf16.mxu0 0
        %284 = vmatpush1.bf16.msra.mxu0 0
        %285 = vmatprep.subr.bf16.mxu0 0
        %286 = vmatpush1.bf16.msra.mxu0 0
        %287 = vmatprep.subr.bf16.mxu0 0
        %288 = vmatpush1.bf16.msra.mxu0 0
        %289 = vmatprep.subr.bf16.mxu0 0
        %290 = vmatpush1.bf16.msra.mxu0 0
        %291 = vmatprep.subr.bf16.mxu0 0
        %292 = vmatpush1.bf16.msra.mxu0 0
        %293 = vmatprep.subr.bf16.mxu0 0
        %294 = vmatpush1.bf16.msra.mxu0 0
        %295 = vmatprep.subr.bf16.mxu0 0
        %296 = vmatpush1.bf16.msra.mxu0 0
        %297 = vmatprep.subr.bf16.mxu0 0
        %298 = vmatpush1.bf16.msra.mxu0 0
        %299 = vmatprep.subr.bf16.mxu0 0
        %300 = vmatpush1.bf16.msra.mxu0 0
        %301 = vmatprep.subr.bf16.mxu0 0
        %302 = vmatpush1.bf16.msra.mxu0 0
        %303 = vmatprep.subr.bf16.mxu0 0
        %304 = vmatpush1.bf16.msra.mxu0 0
        %305 = vmatprep.subr.bf16.mxu0 0
        %306 = vmatpush1.bf16.msra.mxu0 0
        %307 = vmatprep.subr.bf16.mxu0 0
        %308 = vmatpush1.bf16.msra.mxu0 0
        %309 = vmatprep.mubr.bf16.mxu0 0
        %310 = vmatmul.mubr.bf16.gmra.mrb[0].mxu0 %v275
        %v311 = vpop.f32.mrb[0].mxu0
        %v312 = vadd.f32 0.0, %v311
        %v313 = vpop.f32.mrb[0].mxu0
        %v314 = vpop.f32.mrb[0].mxu0
        %v315 = vpop.f32.mrb[0].mxu0
        %316 = vdwg.mxu0
        %v317 = vpack.c.bf16 %v312, %v312
        %319 = vrot.lane.b32.xlu0 %v317, 96
        %v320 = vpop.permute.xlu0 %319
        %vm321 = vcmask 64512
        %v323 = vsel %vm321, %v317, 0
        %v326 = vsel %vm321, %v320, 0
        %328 = vmatprep.subr.bf16.mxu0 0
        %329 = vmatpush1.bf16.xpose.msra.mxu0 %v326
        %330 = vmatprep.subr.bf16.mxu0 0
        %331 = vmatpush1.bf16.xpose.msra.mxu0 0
        %332 = vmatprep.subr.bf16.mxu0 0
        %333 = vmatpush1.bf16.xpose.msra.mxu0 0
        %334 = vmatprep.subr.bf16.mxu0 0
        %335 = vmatpush1.bf16.xpose.msra.mxu0 0
        %336 = vmatprep.subr.bf16.mxu0 0
        %337 = vmatpush1.bf16.xpose.msra.mxu0 0
        %338 = vmatprep.subr.bf16.mxu0 0
        %339 = vmatpush1.bf16.xpose.msra.mxu0 0
        %340 = vmatprep.subr.bf16.mxu0 0
        %341 = vmatpush1.bf16.xpose.msra.mxu0 0
        %342 = vmatprep.subr.bf16.mxu0 0
        %343 = vmatpush1.bf16.xpose.msra.mxu0 0
        %344 = vmatprep.subr.bf16.mxu0 0
        %345 = vmatpush1.bf16.xpose.msra.mxu0 0
        %346 = vmatprep.subr.bf16.mxu0 0
        %347 = vmatpush1.bf16.xpose.msra.mxu0 0
        %348 = vmatprep.subr.bf16.mxu0 0
        %349 = vmatpush1.bf16.xpose.msra.mxu0 0
        %350 = vmatprep.subr.bf16.mxu0 0
        %351 = vmatpush1.bf16.xpose.msra.mxu0 0
        %352 = vmatprep.subr.bf16.mxu0 0
        %353 = vmatpush1.bf16.xpose.msra.mxu0 0
        %354 = vmatprep.subr.bf16.mxu0 0
        %355 = vmatpush1.bf16.xpose.msra.mxu0 0
        %356 = vmatprep.subr.bf16.mxu0 0
        %357 = vmatpush1.bf16.xpose.msra.mxu0 0
        %358 = vmatprep.subr.bf16.mxu0 0
        %359 = vmatpush1.bf16.xpose.msra.mxu0 0
        %360 = vmatprep.mubr.bf16.mxu0 0
        %361 = vmatmul.mubr.bf16.gmra.mrb[0].mxu0 %v323
        %v362 = vpop.f32.mrb[0].mxu0
        %v363 = vadd.f32 0.0, %v362
        %v364 = vpop.f32.mrb[0].mxu0
        %v365 = vpop.f32.mrb[0].mxu0
        %v366 = vpop.f32.mrb[0].mxu0
        %367 = vdwg.mxu0
        %v368 = vsel %vm321, %v363, -inf
        %369 = vmax.xlane.f32.xlu0 %v368
        %v370 = vpop.xlane.xlu0 %369
        %v371 = vsub.f32 %v363, %v370
        %v372 = vmul.f32 %v371, 1.442695
        %v373 = vpow.pop %v372
        %v374 = vsel %vm321, %v373, 0.0
        %375 = vadd.xlane.f32.xlu0 %v374
        %v376 = vpop.xlane.xlu0 %375
        %v377 = vrcp.pop %v376
        %v378 = vmul.f32 %v373, %v377
        %v379 = vpack.c.bf16 %v378, %v378
        %380 = vrot.lane.b32.xlu0 %v317, 64
        %v381 = vpop.permute.xlu0 %380
        %v383 = vsel %vm321, %v379, 0
        %vm385 = vcmask 1043456
        %v387 = vsel %vm385, %v381, 0
        %389 = vmatprep.subr.bf16.mxu0 0
        %390 = vmatpush1.bf16.msra.mxu0 %v387
        %391 = vmatprep.subr.bf16.mxu0 0
        %392 = vmatpush1.bf16.msra.mxu0 0
        %393 = vmatprep.subr.bf16.mxu0 0
        %394 = vmatpush1.bf16.msra.mxu0 0
        %395 = vmatprep.subr.bf16.mxu0 0
        %396 = vmatpush1.bf16.msra.mxu0 0
        %397 = vmatprep.subr.bf16.mxu0 0
        %398 = vmatpush1.bf16.msra.mxu0 0
        %399 = vmatprep.subr.bf16.mxu0 0
        %400 = vmatpush1.bf16.msra.mxu0 0
        %401 = vmatprep.subr.bf16.mxu0 0
        %402 = vmatpush1.bf16.msra.mxu0 0
        %403 = vmatprep.subr.bf16.mxu0 0
        %404 = vmatpush1.bf16.msra.mxu0 0
        %405 = vmatprep.subr.bf16.mxu0 0
        %406 = vmatpush1.bf16.msra.mxu0 0
        %407 = vmatprep.subr.bf16.mxu0 0
        %408 = vmatpush1.bf16.msra.mxu0 0
        %409 = vmatprep.subr.bf16.mxu0 0
        %410 = vmatpush1.bf16.msra.mxu0 0
        %411 = vmatprep.subr.bf16.mxu0 0
        %412 = vmatpush1.bf16.msra.mxu0 0
        %413 = vmatprep.subr.bf16.mxu0 0
        %414 = vmatpush1.bf16.msra.mxu0 0
        %415 = vmatprep.subr.bf16.mxu0 0
        %416 = vmatpush1.bf16.msra.mxu0 0
        %417 = vmatprep.subr.bf16.mxu0 0
        %418 = vmatpush1.bf16.msra.mxu0 0
        %419 = vmatprep.subr.bf16.mxu0 0
        %420 = vmatpush1.bf16.msra.mxu0 0
        %421 = vmatprep.mubr.bf16.mxu0 0
        %422 = vmatmul.mubr.bf16.gmra.mrb[0].mxu0 %v383
        %v423 = vpop.f32.mrb[0].mxu0
        %v424 = vadd.f32 0.0, %v423
        %v425 = vpop.f32.mrb[0].mxu0
        %v426 = vpop.f32.mrb[0].mxu0
        %v427 = vpop.f32.mrb[0].mxu0
        %428 = vdwg.mxu0
        %v429 = vpack.c.bf16 %v424, %v424
        %430 = vrot.lane.b32.xlu0 %v317, 120
        %v431 = vpop.permute.xlu0 %430
        %432 = vrot.lane.b32.xlu0 %v317, 88
        %v433 = vpop.permute.xlu0 %432
        %v435 = vsel %vm321, %v431, 0
        %v438 = vsel %vm321, %v433, 0
        %440 = vmatprep.subr.bf16.mxu0 0
        %441 = vmatpush1.bf16.xpose.msra.mxu0 %v438
        %442 = vmatprep.subr.bf16.mxu0 0
        %443 = vmatpush1.bf16.xpose.msra.mxu0 0
        %444 = vmatprep.subr.bf16.mxu0 0
        %445 = vmatpush1.bf16.xpose.msra.mxu0 0
        %446 = vmatprep.subr.bf16.mxu0 0
        %447 = vmatpush1.bf16.xpose.msra.mxu0 0
        %448 = vmatprep.subr.bf16.mxu0 0
        %449 = vmatpush1.bf16.xpose.msra.mxu0 0
        %450 = vmatprep.subr.bf16.mxu0 0
        %451 = vmatpush1.bf16.xpose.msra.mxu0 0
        %452 = vmatprep.subr.bf16.mxu0 0
        %453 = vmatpush1.bf16.xpose.msra.mxu0 0
        %454 = vmatprep.subr.bf16.mxu0 0
        %455 = vmatpush1.bf16.xpose.msra.mxu0 0
        %456 = vmatprep.subr.bf16.mxu0 0
        %457 = vmatpush1.bf16.xpose.msra.mxu0 0
        %458 = vmatprep.subr.bf16.mxu0 0
        %459 = vmatpush1.bf16.xpose.msra.mxu0 0
        %460 = vmatprep.subr.bf16.mxu0 0
        %461 = vmatpush1.bf16.xpose.msra.mxu0 0
        %462 = vmatprep.subr.bf16.mxu0 0
        %463 = vmatpush1.bf16.xpose.msra.mxu0 0
        %464 = vmatprep.subr.bf16.mxu0 0
        %465 = vmatpush1.bf16.xpose.msra.mxu0 0
        %466 = vmatprep.subr.bf16.mxu0 0
        %467 = vmatpush1.bf16.xpose.msra.mxu0 0
        %468 = vmatprep.subr.bf16.mxu0 0
        %469 = vmatpush1.bf16.xpose.msra.mxu0 0
        %470 = vmatprep.subr.bf16.mxu0 0
        %471 = vmatpush1.bf16.xpose.msra.mxu0 0
        %472 = vmatprep.mubr.bf16.mxu0 0
        %473 = vmatmul.mubr.bf16.gmra.mrb[0].mxu0 %v435
        %v474 = vpop.f32.mrb[0].mxu0
        %v475 = vadd.f32 0.0, %v474
        %v476 = vpop.f32.mrb[0].mxu0
        %v477 = vpop.f32.mrb[0].mxu0
        %v478 = vpop.f32.mrb[0].mxu0
        %479 = vdwg.mxu0
        %v480 = vsel %vm321, %v475, -inf
        %481 = vmax.xlane.f32.xlu0 %v480
        %v482 = vpop.xlane.xlu0 %481
        %v483 = vsub.f32 %v475, %v482
        %v484 = vmul.f32 %v483, 1.442695
        %v485 = vpow.pop %v484
        %v486 = vsel %vm321, %v485, 0.0
        %487 = vadd.xlane.f32.xlu0 %v486
        %v488 = vpop.xlane.xlu0 %487
        %v489 = vrcp.pop %v488
        %v490 = vmul.f32 %v485, %v489
        %v491 = vpack.c.bf16 %v490, %v490
        %492 = vrot.lane.b32.xlu0 %v317, 56
        %v493 = vpop.permute.xlu0 %492
        %v495 = vsel %vm321, %v491, 0
        %v498 = vsel %vm385, %v493, 0
        %500 = vmatprep.subr.bf16.mxu0 0
        %501 = vmatpush1.bf16.msra.mxu0 %v498
        %502 = vmatprep.subr.bf16.mxu0 0
        %503 = vmatpush1.bf16.msra.mxu0 0
        %504 = vmatprep.subr.bf16.mxu0 0
        %505 = vmatpush1.bf16.msra.mxu0 0
        %506 = vmatprep.subr.bf16.mxu0 0
        %507 = vmatpush1.bf16.msra.mxu0 0
        %508 = vmatprep.subr.bf16.mxu0 0
        %509 = vmatpush1.bf16.msra.mxu0 0
        %510 = vmatprep.subr.bf16.mxu0 0
        %511 = vmatpush1.bf16.msra.mxu0 0
        %512 = vmatprep.subr.bf16.mxu0 0
        %513 = vmatpush1.bf16.msra.mxu0 0
        %514 = vmatprep.subr.bf16.mxu0 0
        %515 = vmatpush1.bf16.msra.mxu0 0
        %516 = vmatprep.subr.bf16.mxu0 0
        %517 = vmatpush1.bf16.msra.mxu0 0
        %518 = vmatprep.subr.bf16.mxu0 0
        %519 = vmatpush1.bf16.msra.mxu0 0
        %520 = vmatprep.subr.bf16.mxu0 0
        %521 = vmatpush1.bf16.msra.mxu0 0
        %522 = vmatprep.subr.bf16.mxu0 0
        %523 = vmatpush1.bf16.msra.mxu0 0
        %524 = vmatprep.subr.bf16.mxu0 0
        %525 = vmatpush1.bf16.msra.mxu0 0
        %526 = vmatprep.subr.bf16.mxu0 0
        %527 = vmatpush1.bf16.msra.mxu0 0
        %528 = vmatprep.subr.bf16.mxu0 0
        %529 = vmatpush1.bf16.msra.mxu0 0
        %530 = vmatprep.subr.bf16.mxu0 0
        %531 = vmatpush1.bf16.msra.mxu0 0
        %532 = vmatprep.mubr.bf16.mxu0 0
        %533 = vmatmul.mubr.bf16.gmra.mrb[0].mxu0 %v495
        %v534 = vpop.f32.mrb[0].mxu0
        %v535 = vadd.f32 0.0, %v534
        %v536 = vpop.f32.mrb[0].mxu0
        %v537 = vpop.f32.mrb[0].mxu0
        %v538 = vpop.f32.mrb[0].mxu0
        %539 = vdwg.mxu0
        %v540 = vpack.c.bf16 %v535, %v535
        %541 = vrot.lane.b32.xlu0 %v317, 112
        %v542 = vpop.permute.xlu0 %541
        %543 = vrot.lane.b32.xlu0 %v317, 80
        %v544 = vpop.permute.xlu0 %543
        %v546 = vsel %vm321, %v542, 0
        %v549 = vsel %vm321, %v544, 0
        %551 = vmatprep.subr.bf16.mxu0 0
        %552 = vmatpush1.bf16.xpose.msra.mxu0 %v549
        %553 = vmatprep.subr.bf16.mxu0 0
        %554 = vmatpush1.bf16.xpose.msra.mxu0 0
        %555 = vmatprep.subr.bf16.mxu0 0
        %556 = vmatpush1.bf16.xpose.msra.mxu0 0
        %557 = vmatprep.subr.bf16.mxu0 0
        %558 = vmatpush1.bf16.xpose.msra.mxu0 0
        %559 = vmatprep.subr.bf16.mxu0 0
        %560 = vmatpush1.bf16.xpose.msra.mxu0 0
        %561 = vmatprep.subr.bf16.mxu0 0
        %562 = vmatpush1.bf16.xpose.msra.mxu0 0
        %563 = vmatprep.subr.bf16.mxu0 0
        %564 = vmatpush1.bf16.xpose.msra.mxu0 0
        %565 = vmatprep.subr.bf16.mxu0 0
        %566 = vmatpush1.bf16.xpose.msra.mxu0 0
        %567 = vmatprep.subr.bf16.mxu0 0
        %568 = vmatpush1.bf16.xpose.msra.mxu0 0
        %569 = vmatprep.subr.bf16.mxu0 0
        %570 = vmatpush1.bf16.xpose.msra.mxu0 0
        %571 = vmatprep.subr.bf16.mxu0 0
        %572 = vmatpush1.bf16.xpose.msra.mxu0 0
        %573 = vmatprep.subr.bf16.mxu0 0
        %574 = vmatpush1.bf16.xpose.msra.mxu0 0
        %575 = vmatprep.subr.bf16.mxu0 0
        %576 = vmatpush1.bf16.xpose.msra.mxu0 0
        %577 = vmatprep.subr.bf16.mxu0 0
        %578 = vmatpush1.bf16.xpose.msra.mxu0 0
        %579 = vmatprep.subr.bf16.mxu0 0
        %580 = vmatpush1.bf16.xpose.msra.mxu0 0
        %581 = vmatprep.subr.bf16.mxu0 0
        %582 = vmatpush1.bf16.xpose.msra.mxu0 0
        %583 = vmatprep.mubr.bf16.mxu0 0
        %584 = vmatmul.mubr.bf16.gmra.mrb[0].mxu0 %v546
        %v585 = vpop.f32.mrb[0].mxu0
        %v586 = vadd.f32 0.0, %v585
        %v587 = vpop.f32.mrb[0].mxu0
        %v588 = vpop.f32.mrb[0].mxu0
        %v589 = vpop.f32.mrb[0].mxu0
        %590 = vdwg.mxu0
        %v591 = vsel %vm321, %v586, -inf
        %592 = vmax.xlane.f32.xlu0 %v591
        %v593 = vpop.xlane.xlu0 %592
        %v594 = vsub.f32 %v586, %v593
        %v595 = vmul.f32 %v594, 1.442695
        %v596 = vpow.pop %v595
        %v597 = vsel %vm321, %v596, 0.0
        %598 = vadd.xlane.f32.xlu0 %v597
        %v599 = vpop.xlane.xlu0 %598
        %v600 = vrcp.pop %v599
        %v601 = vmul.f32 %v596, %v600
        %v602 = vpack.c.bf16 %v601, %v601
        %603 = vrot.lane.b32.xlu0 %v317, 48
        %v604 = vpop.permute.xlu0 %603
        %v606 = vsel %vm321, %v602, 0
        %v609 = vsel %vm385, %v604, 0
        %611 = vmatprep.subr.bf16.mxu0 0
        %612 = vmatpush1.bf16.msra.mxu0 %v609
        %613 = vmatprep.subr.bf16.mxu0 0
        %614 = vmatpush1.bf16.msra.mxu0 0
        %615 = vmatprep.subr.bf16.mxu0 0
        %616 = vmatpush1.bf16.msra.mxu0 0
        %617 = vmatprep.subr.bf16.mxu0 0
        %618 = vmatpush1.bf16.msra.mxu0 0
        %619 = vmatprep.subr.bf16.mxu0 0
        %620 = vmatpush1.bf16.msra.mxu0 0
        %621 = vmatprep.subr.bf16.mxu0 0
        %622 = vmatpush1.bf16.msra.mxu0 0
        %623 = vmatprep.subr.bf16.mxu0 0
        %624 = vmatpush1.bf16.msra.mxu0 0
        %625 = vmatprep.subr.bf16.mxu0 0
        %626 = vmatpush1.bf16.msra.mxu0 0
        %627 = vmatprep.subr.bf16.mxu0 0
        %628 = vmatpush1.bf16.msra.mxu0 0
        %629 = vmatprep.subr.bf16.mxu0 0
        %630 = vmatpush1.bf16.msra.mxu0 0
        %631 = vmatprep.subr.bf16.mxu0 0
        %632 = vmatpush1.bf16.msra.mxu0 0
        %633 = vmatprep.subr.bf16.mxu0 0
        %634 = vmatpush1.bf16.msra.mxu0 0
        %635 = vmatprep.subr.bf16.mxu0 0
        %636 = vmatpush1.bf16.msra.mxu0 0
        %637 = vmatprep.subr.bf16.mxu0 0
        %638 = vmatpush1.bf16.msra.mxu0 0
        %639 = vmatprep.subr.bf16.mxu0 0
        %640 = vmatpush1.bf16.msra.mxu0 0
        %641 = vmatprep.subr.bf16.mxu0 0
        %642 = vmatpush1.bf16.msra.mxu0 0
        %643 = vmatprep.mubr.bf16.mxu0 0
        %644 = vmatmul.mubr.bf16.gmra.mrb[0].mxu0 %v606
        %v645 = vpop.f32.mrb[0].mxu0
        %v646 = vadd.f32 0.0, %v645
        %v647 = vpop.f32.mrb[0].mxu0
        %v648 = vpop.f32.mrb[0].mxu0
        %v649 = vpop.f32.mrb[0].mxu0
        %650 = vdwg.mxu0
        %v651 = vpack.c.bf16 %v646, %v646
        %652 = vrot.lane.b32.xlu0 %v317, 104
        %v653 = vpop.permute.xlu0 %652
        %654 = vrot.lane.b32.xlu0 %v317, 72
        %v655 = vpop.permute.xlu0 %654
        %v657 = vsel %vm321, %v653, 0
        %v660 = vsel %vm321, %v655, 0
        %662 = vmatprep.subr.bf16.mxu0 0
        %663 = vmatpush1.bf16.xpose.msra.mxu0 %v660
        %664 = vmatprep.subr.bf16.mxu0 0
        %665 = vmatpush1.bf16.xpose.msra.mxu0 0
        %666 = vmatprep.subr.bf16.mxu0 0
        %667 = vmatpush1.bf16.xpose.msra.mxu0 0
        %668 = vmatprep.subr.bf16.mxu0 0
        %669 = vmatpush1.bf16.xpose.msra.mxu0 0
        %670 = vmatprep.subr.bf16.mxu0 0
        %671 = vmatpush1.bf16.xpose.msra.mxu0 0
        %672 = vmatprep.subr.bf16.mxu0 0
        %673 = vmatpush1.bf16.xpose.msra.mxu0 0
        %674 = vmatprep.subr.bf16.mxu0 0
        %675 = vmatpush1.bf16.xpose.msra.mxu0 0
        %676 = vmatprep.subr.bf16.mxu0 0
        %677 = vmatpush1.bf16.xpose.msra.mxu0 0
        %678 = vmatprep.subr.bf16.mxu0 0
        %679 = vmatpush1.bf16.xpose.msra.mxu0 0
        %680 = vmatprep.subr.bf16.mxu0 0
        %681 = vmatpush1.bf16.xpose.msra.mxu0 0
        %682 = vmatprep.subr.bf16.mxu0 0
        %683 = vmatpush1.bf16.xpose.msra.mxu0 0
        %684 = vmatprep.subr.bf16.mxu0 0
        %685 = vmatpush1.bf16.xpose.msra.mxu0 0
        %686 = vmatprep.subr.bf16.mxu0 0
        %687 = vmatpush1.bf16.xpose.msra.mxu0 0
        %688 = vmatprep.subr.bf16.mxu0 0
        %689 = vmatpush1.bf16.xpose.msra.mxu0 0
        %690 = vmatprep.subr.bf16.mxu0 0
        %691 = vmatpush1.bf16.xpose.msra.mxu0 0
        %692 = vmatprep.subr.bf16.mxu0 0
        %693 = vmatpush1.bf16.xpose.msra.mxu0 0
        %694 = vmatprep.mubr.bf16.mxu0 0
        %695 = vmatmul.mubr.bf16.gmra.mrb[0].mxu0 %v657
        %v696 = vpop.f32.mrb[0].mxu0
        %v697 = vadd.f32 0.0, %v696
        %v698 = vpop.f32.mrb[0].mxu0
        %v699 = vpop.f32.mrb[0].mxu0
        %v700 = vpop.f32.mrb[0].mxu0
        %701 = vdwg.mxu0
        %v702 = vsel %vm321, %v697, -inf
        %703 = vmax.xlane.f32.xlu0 %v702
        %v704 = vpop.xlane.xlu0 %703
        %v705 = vsub.f32 %v697, %v704
        %v706 = vmul.f32 %v705, 1.442695
        %v707 = vpow.pop %v706
        %v708 = vsel %vm321, %v707, 0.0
        %709 = vadd.xlane.f32.xlu0 %v708
        %v710 = vpop.xlane.xlu0 %709
        %v711 = vrcp.pop %v710
        %v712 = vmul.f32 %v707, %v711
        %v713 = vpack.c.bf16 %v712, %v712
        %714 = vrot.lane.b32.xlu0 %v317, 40
        %v715 = vpop.permute.xlu0 %714
        %v717 = vsel %vm321, %v713, 0
        %v720 = vsel %vm385, %v715, 0
        %722 = vmatprep.subr.bf16.mxu0 0
        %723 = vmatpush1.bf16.msra.mxu0 %v720
        %724 = vmatprep.subr.bf16.mxu0 0
        %725 = vmatpush1.bf16.msra.mxu0 0
        %726 = vmatprep.subr.bf16.mxu0 0
        %727 = vmatpush1.bf16.msra.mxu0 0
        %728 = vmatprep.subr.bf16.mxu0 0
        %729 = vmatpush1.bf16.msra.mxu0 0
        %730 = vmatprep.subr.bf16.mxu0 0
        %731 = vmatpush1.bf16.msra.mxu0 0
        %732 = vmatprep.subr.bf16.mxu0 0
        %733 = vmatpush1.bf16.msra.mxu0 0
        %734 = vmatprep.subr.bf16.mxu0 0
        %735 = vmatpush1.bf16.msra.mxu0 0
        %736 = vmatprep.subr.bf16.mxu0 0
        %737 = vmatpush1.bf16.msra.mxu0 0
        %738 = vmatprep.subr.bf16.mxu0 0
        %739 = vmatpush1.bf16.msra.mxu0 0
        %740 = vmatprep.subr.bf16.mxu0 0
        %741 = vmatpush1.bf16.msra.mxu0 0
        %742 = vmatprep.subr.bf16.mxu0 0
        %743 = vmatpush1.bf16.msra.mxu0 0
        %744 = vmatprep.subr.bf16.mxu0 0
        %745 = vmatpush1.bf16.msra.mxu0 0
        %746 = vmatprep.subr.bf16.mxu0 0
        %747 = vmatpush1.bf16.msra.mxu0 0
        %748 = vmatprep.subr.bf16.mxu0 0
        %749 = vmatpush1.bf16.msra.mxu0 0
        %750 = vmatprep.subr.bf16.mxu0 0
        %751 = vmatpush1.bf16.msra.mxu0 0
        %752 = vmatprep.subr.bf16.mxu0 0
        %753 = vmatpush1.bf16.msra.mxu0 0
        %754 = vmatprep.mubr.bf16.mxu0 0
        %755 = vmatmul.mubr.bf16.gmra.mrb[0].mxu0 %v717
        %v756 = vpop.f32.mrb[0].mxu0
        %v757 = vadd.f32 0.0, %v756
        %v758 = vpop.f32.mrb[0].mxu0
        %v759 = vpop.f32.mrb[0].mxu0
        %v760 = vpop.f32.mrb[0].mxu0
        %761 = vdwg.mxu0
        %v762 = vpack.c.bf16 %v757, %v757
        %764 = vrot.lane.b32.xlu0 %v540, 8
        %v765 = vpop.permute.xlu0 %764
        %767 = vrot.lane.b32.xlu0 %v651, 16
        %v768 = vpop.permute.xlu0 %767
        %770 = vrot.lane.b32.xlu0 %v762, 24
        %v771 = vpop.permute.xlu0 %770
        %v774 = vsel %vm321, %v429, %v765
        %vm775 = vcmask 130048
        %v777 = vsel %vm775, %v774, %v768
        %vm778 = vcmask 195584
        %v780 = vsel %vm778, %v777, %v771
        %v781 = vld [vmem:[#allocation7] sm:$0xf]
        %v782 = vld [vmem:[#allocation7 + $0x4] sm:$0xf]
        %v783 = vld [vmem:[#allocation7 + $0x8] sm:$0xf]
        %v784 = vld [vmem:[#allocation7 + $0xc] sm:$0xf]
        %v785 = vld [vmem:[#allocation8] sm:$0x1]
        %v787 = vlaneseq
        %v788 = vshrl.u32 %v787, 7
        %v789 = vsub.s32 0, %v788
        %v790 = vrot.slane %v785, %v789
        %v796 = vunpack.c.l.b16 %v781
        %v797 = vunpack.c.l.b16 %v782
        %v798 = vunpack.c.l.b16 %v783
        %v799 = vunpack.c.l.b16 %v784
        %v800 = vpack.c.b16 %v797, %v796
        %v801 = vpack.c.b16 %v799, %v798
        %v804 = vsel %vm273, %v780, 0
        %806 = vmatprep.subr.bf16.mxu0 0
        %807 = vmatpush1.bf16.msra.mxu0 %v800
        %808 = vmatprep.subr.bf16.mxu0 0
        %809 = vmatpush1.bf16.msra.mxu0 %v801
        %810 = vmatprep.subr.bf16.mxu0 0
        %811 = vmatpush1.bf16.msra.mxu0 0
        %812 = vmatprep.subr.bf16.mxu0 0
        %813 = vmatpush1.bf16.msra.mxu0 0
        %814 = vmatprep.subr.bf16.mxu0 0
        %815 = vmatpush1.bf16.msra.mxu0 0
        %816 = vmatprep.subr.bf16.mxu0 0
        %817 = vmatpush1.bf16.msra.mxu0 0
        %818 = vmatprep.subr.bf16.mxu0 0
        %819 = vmatpush1.bf16.msra.mxu0 0
        %820 = vmatprep.subr.bf16.mxu0 0
        %821 = vmatpush1.bf16.msra.mxu0 0
        %822 = vmatprep.subr.bf16.mxu0 0
        %823 = vmatpush1.bf16.msra.mxu0 0
        %824 = vmatprep.subr.bf16.mxu0 0
        %825 = vmatpush1.bf16.msra.mxu0 0
        %826 = vmatprep.subr.bf16.mxu0 0
        %827 = vmatpush1.bf16.msra.mxu0 0
        %828 = vmatprep.subr.bf16.mxu0 0
        %829 = vmatpush1.bf16.msra.mxu0 0
        %830 = vmatprep.subr.bf16.mxu0 0
        %831 = vmatpush1.bf16.msra.mxu0 0
        %832 = vmatprep.subr.bf16.mxu0 0
        %833 = vmatpush1.bf16.msra.mxu0 0
        %834 = vmatprep.subr.bf16.mxu0 0
        %835 = vmatpush1.bf16.msra.mxu0 0
        %836 = vmatprep.subr.bf16.mxu0 0
        %837 = vmatpush1.bf16.msra.mxu0 0
        %838 = vmatprep.mubr.bf16.mxu0 0
        %839 = vmatmul.mubr.bf16.gmra.mrb[0].mxu0 %v804
        %v840 = vpop.f32.mrb[0].mxu0
        %v841 = vadd.f32 %v790, %v840
        %v842 = vpop.f32.mrb[0].mxu0
        %v843 = vpop.f32.mrb[0].mxu0
        %v844 = vpop.f32.mrb[0].mxu0
        %845 = vdwg.mxu0
        %846 = vst.msk [vmem:[%s254] sm:$0xff] %vm273, %v841
        %s847 = sand.u32 %s120, 1
        %s848 = scalar_lea.sflag [#allocation4], %s847
        %s849 = sand.u32 %s120, 1
        %s850 = smul.addr %s849, 8
        %s851 = scalar_lea.vmem [#allocation10], %s850
        // Predicated region
        $region53: #{tpu_custom_call.1} parent=35 // pred_check
          %p852 = pneg %p130
        $region54: #{tpu_custom_call.1} parent=35 // pred_check_branch
          %854 = sbr.rel (%p852) target = $region56
        $region55: #{tpu_custom_call.1} parent=35 // pred_region
          %s856 = ssub.s32 128, 128
          %857 = vsyncadd %s848, %s856
          %s858 = smul.addr %s23, 128
          %s859 = scalar_lea.hbm %s4, %s858
          %s861 = sshll.u32 %s851, 4
          %s862 = int_to_ptr.vmem [resolvable:$true] %s861
          %864 = dma.vmem_to_hbm [thread:$0]  %s862, 128, %s859, %s848
        $region56: #{tpu_custom_call.1} parent=35 // pred_fallthru
          _
      $region36: #{tpu_custom_call.1} parent=5 // pred_fallthru
        _
      %p865 = scmp.le.s32.totalorder 2, %s18
      // Predicated region
      $region57: #{tpu_custom_call.1} parent=5 // pred_check
        %p866 = pneg %p865
      $region58: #{tpu_custom_call.1} parent=5 // pred_check_branch
        %868 = sbr.rel (%p866) target = $region60
      $region59: #{tpu_custom_call.1} parent=5 // pred_region
        %s869 = ssub.s32 %s18, 2
        // Predicated region
        $region61: #{tpu_custom_call.1} parent=59 // pred_check
          %p870 = pneg %p136
        $region62: #{tpu_custom_call.1} parent=59 // pred_check_branch
          %872 = sbr.rel (%p870) target = $region64
        $region63: #{tpu_custom_call.1} parent=59 // pred_region
          %s873 = sand.u32 %s121, 1
          %s874 = scalar_lea.sflag [#allocation4], %s873
          %s875 = sand.u32 %s121, 1
          %s876 = smul.addr %s875, 8
          %s877 = scalar_lea.vmem [#allocation10], %s876
          %878 = dma.done %s874, 128
        $region64: #{tpu_custom_call.1} parent=59 // pred_fallthru
          _
      $region60: #{tpu_custom_call.1} parent=5 // pred_fallthru
        _
    $region6: #{tpu_custom_call.1} parent=1 // loop_footer
      %s22 = sadd.s32 1, %s18
    $region7: #{tpu_custom_call.1} parent=1 // loop_footer_branch
      %17 = sbr.rel target = $region3
    $region8: #{tpu_custom_call.1} parent=1 // loop_exit
      _
    %879 = vsyncpa [#allocation3], 1
    %s880 = scalar_lea.sflag [#allocation3], 1
    %881 = vsyncpa %s880, 1
    %882 = vsyncpa [#allocation6], 1
    %883 = vsyncpa [#allocation9], 1
    %884 = vsyncpa [#allocation4], 1
    %s885 = scalar_lea.sflag [#allocation4], 1
    %886 = vsyncpa %s885, 1

// kernel: tpu_custom_call.1
$region0: #{tpu_custom_call.1}
  #allocation0 [shape = 'u32[]', space=smem, size = 0x4, offset = 0x4, fixed_abs, tag = 'smem constant byte address 0x4 - core index']
  #allocation1 [shape = 'u32[144,128]{1,0:T(1,128)}', space=vmem, size = 0x12000, scoped, tag = 'internal scratch']
  %s0 = inlined_call_operand.hbm [shape: bf16[2,8,32], index: 0, kind: input, shape index: {}]
  %s1 = inlined_call_operand.hbm [shape: bf16[32,96], index: 1, kind: input, shape index: {}]
  %s2 = inlined_call_operand.hbm [shape: bf16[32,32], index: 2, kind: input, shape index: {}]
  %s3 = inlined_call_operand.hbm [shape: f32[1,32], index: 3, kind: input, shape index: {}]
  %s4 = inlined_call_operand.hbm [shape: f32[2,8,32], index: 4, kind: output, shape index: {}]
  %s5 = sld [smem:[#allocation0]]
  $region65: #{tpu_custom_call.1} parent=0
    _
  %s7 = ssub.s32 1, %s5
  %s8 = scalar_select 0, %s7, %s5
  $region1: #{tpu_custom_call.1} parent=0
    #allocation2 [shape = 'u8[4096]{0}', space=vmem, size = 0x1000, scoped, tag = 'input window, operand 0']
    #allocation3 [shape = 's32[2]{0}', space=sflag, size = 0x8, scoped, tag = 'scoped memory for tpu_custom_call.1']
    #allocation4 [shape = 's32[2]{0}', space=sflag, size = 0x8, scoped, tag = 'scoped memory for tpu_custom_call.1']
    #allocation5 [shape = 'u8[8192]{0}', space=vmem, size = 0x2000, scoped, tag = 'input window, operand 1, single buffered']
    #allocation6 [shape = 's32[1]{0}', space=sflag, size = 0x4, scoped, tag = 'scoped memory for tpu_custom_call.1']
    #allocation7 [shape = 'u8[8192]{0}', space=vmem, size = 0x2000, scoped, tag = 'input window, operand 2, single buffered']
    #allocation8 [shape = 'u8[512]{0}', space=vmem, size = 0x400, scoped, tag = 'input window, operand 3, single buffered']
    #allocation9 [shape = 's32[1]{0}', space=sflag, size = 0x4, scoped, tag = 'scoped memory for tpu_custom_call.1']
    #allocation10 [shape = 'u8[8192]{0}', space=vmem, size = 0x2000, scoped, tag = 'output window, operand 0']
    %9 = vsyncpa [#allocation3], 0
    %s10 = scalar_lea.sflag [#allocation3], 1
    %11 = vsyncpa %s10, 0
    %12 = vsyncpa [#allocation6], 0
    %13 = vsyncpa [#allocation9], 0
    %14 = vsyncpa [#allocation4], 0
    %s15 = scalar_lea.sflag [#allocation4], 1
    %16 = vsyncpa %s15, 0
    loop: start=0, step=1, limit=4
    $region2: #{tpu_custom_call.1} parent=1 // loop_pre_header
      _
    $region3: #{tpu_custom_call.1} parent=1 // loop_header
      %s18 = sphi 0, %s22
      %p19 = scmp.ge.s32.totalorder %s18, 4
      %s28 = sphi 0, %s30
      %s31 = sphi 0, %s28
      %s32 = sphi 0, %s31
      %s48 = sphi 0, %s32
      %s52 = sphi 0, %s52
      %s54 = sphi 0, %s52
      %s55 = sphi 0, %s54
      %s69 = sphi 0, %s55
      %s73 = sphi 0, %s73
      %s75 = sphi 0, %s73
      %s76 = sphi 0, %s75
      %s90 = sphi 0, %s76
      %s94 = sphi 0, %s94
      %s96 = sphi 0, %s94
      %s97 = sphi 0, %s96
      %s111 = sphi 0, %s97
      %s117 = sphi 0, %s119
      %s120 = sphi 0, %s117
      %s121 = sphi 0, %s120
      %s137 = sphi 0, %s121
    $region4: #{tpu_custom_call.1} parent=1 // loop_header_branch
      %21 = sbr.rel (%p19) target = $region8
    $region5: #{tpu_custom_call.1} parent=1 // loop_body
      %s23 = ssub.s32 %s18, 1
      %s24 = ssub.s32 %s18, 2
      %s25 = sadd.s32 %s18, 1
      %s26 = ssub.s32 %s18, %s25
      %p27 = scmp.eq.s32.totalorder %s26, 0
      %s29 = sadd.s32 %s28, 1
      %s30 = scalar_select %p27, %s28, %s29
      %p33 = pneg %p27
      %p34 = scmp.eq.s32.totalorder %s18, 1
      %p35 = por %p33, %p34
      %p36 = scmp.ne.s32.totalorder %s28, %s31
      %p37 = scmp.eq.s32.totalorder %s18, 0
      %p38 = por %p36, %p37
      %p39 = scmp.ne.s32.totalorder %s28, %s31
      %p40 = scmp.eq.s32.totalorder %s23, 1
      %p41 = por %p39, %p40
      %p42 = scmp.ne.s32.totalorder %s31, %s32
      %p43 = scmp.eq.s32.totalorder %s23, 0
      %p44 = por %p42, %p43
      %p45 = scmp.ne.s32.totalorder %s31, %s32
      %p46 = scmp.eq.s32.totalorder %s24, 1
      %p47 = por %p45, %p46
      %p49 = scmp.ne.s32.totalorder %s32, %s48
      %p50 = scmp.eq.s32.totalorder %s24, 0
      %p51 = por %p49, %p50
      %s53 = sadd.s32 %s52, 1
      %p56 = scmp.eq.s32.totalorder %s18, 1
      %p57 = scmp.ne.s32.totalorder %s52, %s54
      %p58 = scmp.eq.s32.totalorder %s18, 0
      %p59 = por %p57, %p58
      %p60 = scmp.ne.s32.totalorder %s52, %s54
      %p61 = scmp.eq.s32.totalorder %s23, 1
      %p62 = por %p60, %p61
      %p63 = scmp.ne.s32.totalorder %s54, %s55
      %p64 = scmp.eq.s32.totalorder %s23, 0
      %p65 = por %p63, %p64
      %p66 = scmp.ne.s32.totalorder %s54, %s55
      %p67 = scmp.eq.s32.totalorder %s24, 1
      %p68 = por %p66, %p67
      %p70 = scmp.ne.s32.totalorder %s55, %s69
      %p71 = scmp.eq.s32.totalorder %s24, 0
      %p72 = por %p70, %p71
      %s74 = sadd.s32 %s73, 1
      %p77 = scmp.eq.s32.totalorder %s18, 1
      %p78 = scmp.ne.s32.totalorder %s73, %s75
      %p79 = scmp.eq.s32.totalorder %s18, 0
      %p80 = por %p78, %p79
      %p81 = scmp.ne.s32.totalorder %s73, %s75
      %p82 = scmp.eq.s32.totalorder %s23, 1
      %p83 = por %p81, %p82
      %p84 = scmp.ne.s32.totalorder %s75, %s76
      %p85 = scmp.eq.s32.totalorder %s23, 0
      %p86 = por %p84, %p85
      %p87 = scmp.ne.s32.totalorder %s75, %s76
      %p88 = scmp.eq.s32.totalorder %s24, 1
      %p89 = por %p87, %p88
      %p91 = scmp.ne.s32.totalorder %s76, %s90
      %p92 = scmp.eq.s32.totalorder %s24, 0
      %p93 = por %p91, %p92
      %s95 = sadd.s32 %s94, 1
      %p98 = scmp.eq.s32.totalorder %s18, 1
      %p99 = scmp.ne.s32.totalorder %s94, %s96
      %p100 = scmp.eq.s32.totalorder %s18, 0
      %p101 = por %p99, %p100
      %p102 = scmp.ne.s32.totalorder %s94, %s96
      %p103 = scmp.eq.s32.totalorder %s23, 1
      %p104 = por %p102, %p103
      %p105 = scmp.ne.s32.totalorder %s96, %s97
      %p106 = scmp.eq.s32.totalorder %s23, 0
      %p107 = por %p105, %p106
      %p108 = scmp.ne.s32.totalorder %s96, %s97
      %p109 = scmp.eq.s32.totalorder %s24, 1
      %p110 = por %p108, %p109
      %p112 = scmp.ne.s32.totalorder %s97, %s111
      %p113 = scmp.eq.s32.totalorder %s24, 0
      %p114 = por %p112, %p113
      %s115 = ssub.s32 %s18, %s25
      %p116 = scmp.eq.s32.totalorder %s115, 0
      %s118 = sadd.s32 %s117, 1
      %s119 = scalar_select %p116, %s117, %s118
      %p122 = pneg %p116
      %p123 = scmp.eq.s32.totalorder %s18, 1
      %p124 = por %p122, %p123
      %p125 = scmp.ne.s32.totalorder %s117, %s120
      %p126 = scmp.eq.s32.totalorder %s18, 0
      %p127 = por %p125, %p126
      %p128 = scmp.ne.s32.totalorder %s117, %s120
      %p129 = scmp.eq.s32.totalorder %s23, 1
      %p130 = por %p128, %p129
      %p131 = scmp.ne.s32.totalorder %s120, %s121
      %p132 = scmp.eq.s32.totalorder %s23, 0
      %p133 = por %p131, %p132
      %p134 = scmp.ne.s32.totalorder %s120, %s121
      %p135 = scmp.eq.s32.totalorder %s24, 1
      %p136 = por %p134, %p135
      %p138 = scmp.ne.s32.totalorder %s121, %s137
      %p139 = scmp.eq.s32.totalorder %s24, 0
      %p140 = por %p138, %p139
      %p141 = scmp.le.s32.totalorder 1, %s18
      %p142 = scmp.lt.s32.totalorder %s18, 3
      %p143 = pnand %p141, %p142
      %p144 = pneg %p143
      // Predicated region
      $region9: #{tpu_custom_call.1} parent=5 // pred_check
        _
      $region10: #{tpu_custom_call.1} parent=5 // pred_check_branch
        %146 = sbr.rel (%p143) target = $region12
      $region11: #{tpu_custom_call.1} parent=5 // pred_region
        %s147 = ssub.s32 %s18, 1
        // Predicated region
        $region13: #{tpu_custom_call.1} parent=11 // pred_check
          %p148 = pneg %p65
        $region14: #{tpu_custom_call.1} parent=11 // pred_check_branch
          %150 = sbr.rel (%p148) target = $region16
        $region15: #{tpu_custom_call.1} parent=11 // pred_region
          %s152 = ssub.s32 256, 256
          %153 = vsyncadd [#allocation6], %s152
          %s154 = sshll.u32 [#allocation5], 4
          %s155 = int_to_ptr.vmem [resolvable:$true] %s154
          %160 = dma.hbm_to_vmem [thread:$0]  %s1, 256, %s155, [#allocation6], 64, 64, 4
        $region16: #{tpu_custom_call.1} parent=11 // pred_fallthru
          _
        // Predicated region
        $region17: #{tpu_custom_call.1} parent=11 // pred_check
          %p161 = pneg %p86
        $region18: #{tpu_custom_call.1} parent=11 // pred_check_branch
          %163 = sbr.rel (%p161) target = $region20
        $region19: #{tpu_custom_call.1} parent=11 // pred_region
          %s165 = ssub.s32 256, 256
          %166 = vsyncadd [#allocation6], %s165
          %s167 = sshll.u32 [#allocation7], 4
          %s168 = int_to_ptr.vmem [resolvable:$true] %s167
          %173 = dma.hbm_to_vmem [thread:$0]  %s2, 256, %s168, [#allocation6], 64, 64, 4
        $region20: #{tpu_custom_call.1} parent=11 // pred_fallthru
          _
        // Predicated region
        $region21: #{tpu_custom_call.1} parent=11 // pred_check
          %p174 = pneg %p107
        $region22: #{tpu_custom_call.1} parent=11 // pred_check_branch
          %176 = sbr.rel (%p174) target = $region24
        $region23: #{tpu_custom_call.1} parent=11 // pred_region
          %s178 = ssub.s32 16, 16
          %179 = vsyncadd [#allocation9], %s178
          %s181 = sshll.u32 [#allocation8], 4
          %s182 = int_to_ptr.vmem [resolvable:$true] %s181
          %184 = dma.hbm_to_vmem [thread:$0]  %s3, 16, %s182, [#allocation9]
        $region24: #{tpu_custom_call.1} parent=11 // pred_fallthru
          _
      $region12: #{tpu_custom_call.1} parent=5 // pred_fallthru
        _
      %p185 = scmp.lt.s32.totalorder %s18, 2
      // Predicated region
      $region25: #{tpu_custom_call.1} parent=5 // pred_check
        %p186 = pneg %p185
      $region26: #{tpu_custom_call.1} parent=5 // pred_check_branch
        %188 = sbr.rel (%p186) target = $region28
      $region27: #{tpu_custom_call.1} parent=5 // pred_region
        // Predicated region
        $region29: #{tpu_custom_call.1} parent=27 // pred_check
          %p189 = pneg %p38
        $region30: #{tpu_custom_call.1} parent=27 // pred_check_branch
          %191 = sbr.rel (%p189) target = $region32
        $region31: #{tpu_custom_call.1} parent=27 // pred_region
          %s192 = sand.u32 %s28, 1
          %s193 = scalar_lea.sflag [#allocation3], %s192
          %s194 = sand.u32 %s28, 1
          %s195 = smul.addr %s194, 4
          %s196 = scalar_lea.vmem [#allocation2], %s195
          %s198 = ssub.s32 64, 64
          %199 = vsyncadd %s193, %s198
          %s200 = smul.addr %s18, 64
          %s201 = scalar_lea.hbm %s0, %s200
          %s203 = sshll.u32 %s196, 4
          %s204 = int_to_ptr.vmem [resolvable:$true] %s203
          %206 = dma.hbm_to_vmem [thread:$0]  %s201, 64, %s204, %s193
        $region32: #{tpu_custom_call.1} parent=27 // pred_fallthru
          _
      $region28: #{tpu_custom_call.1} parent=5 // pred_fallthru
        _
      %p207 = scmp.le.s32.totalorder 1, %s18
      %p208 = scmp.lt.s32.totalorder %s18, 3
      %p209 = pnand %p207, %p208
      %p210 = pneg %p209
      // Predicated region
      $region33: #{tpu_custom_call.1} parent=5 // pred_check
        _
      $region34: #{tpu_custom_call.1} parent=5 // pred_check_branch
        %212 = sbr.rel (%p209) target = $region36
      $region35: #{tpu_custom_call.1} parent=5 // pred_region
        %s213 = ssub.s32 %s18, 1
        %s214 = sand.u32 %s31, 1
        %s215 = scalar_lea.sflag [#allocation3], %s214
        %s216 = sand.u32 %s31, 1
        %s217 = smul.addr %s216, 4
        %s218 = scalar_lea.vmem [#allocation2], %s217
        // Predicated region
        $region37: #{tpu_custom_call.1} parent=35 // pred_check
          %p219 = pneg %p44
        $region38: #{tpu_custom_call.1} parent=35 // pred_check_branch
          %221 = sbr.rel (%p219) target = $region40
        $region39: #{tpu_custom_call.1} parent=35 // pred_region
          %222 = dma.done %s215, 64
        $region40: #{tpu_custom_call.1} parent=35 // pred_fallthru
          _
        // Predicated region
        $region41: #{tpu_custom_call.1} parent=35 // pred_check
          %p223 = pneg %p65
        $region42: #{tpu_custom_call.1} parent=35 // pred_check_branch
          %225 = sbr.rel (%p223) target = $region44
        $region43: #{tpu_custom_call.1} parent=35 // pred_region
          %226 = dma.done [#allocation6], 256
        $region44: #{tpu_custom_call.1} parent=35 // pred_fallthru
          _
        // Predicated region
        $region45: #{tpu_custom_call.1} parent=35 // pred_check
          %p227 = pneg %p86
        $region46: #{tpu_custom_call.1} parent=35 // pred_check_branch
          %229 = sbr.rel (%p227) target = $region48
        $region47: #{tpu_custom_call.1} parent=35 // pred_region
          %230 = dma.done [#allocation6], 256
        $region48: #{tpu_custom_call.1} parent=35 // pred_fallthru
          _
        // Predicated region
        $region49: #{tpu_custom_call.1} parent=35 // pred_check
          %p231 = pneg %p107
        $region50: #{tpu_custom_call.1} parent=35 // pred_check_branch
          %233 = sbr.rel (%p231) target = $region52
        $region51: #{tpu_custom_call.1} parent=35 // pred_region
          %234 = dma.done [#allocation9], 16
        $region52: #{tpu_custom_call.1} parent=35 // pred_fallthru
          _
        %s235 = sand.u32 %s31, 1
        %s236 = scalar_lea.sflag [#allocation3], %s235
        %s237 = sand.u32 %s31, 1
        %s238 = smul.addr %s237, 4
        %s239 = scalar_lea.vmem [#allocation2], %s238
        %p240 = pneg %p44
        %p241 = pneg %p41
        %p242 = pneg %p65
        %p243 = pneg %p62
        %p244 = pneg %p86
        %p245 = pneg %p83
        %p246 = pneg %p107
        %p247 = pneg %p104
        %p248 = pneg %p133
        %p249 = pneg %p130
        %s250 = sand.u32 %s120, 1
        %s251 = scalar_lea.sflag [#allocation4], %s250
        %s252 = sand.u32 %s120, 1
        %s253 = smul.addr %s252, 8
        %s254 = scalar_lea.vmem [#allocation10], %s253
        %v256 = vld [vmem:[%s218] sm:$0xf]
        %v257 = vld [vmem:[#allocation5] sm:$0xf]
        %v258 = vld [vmem:[#allocation5 + $0x4] sm:$0xf]
        %v259 = vld [vmem:[#allocation5 + $0x8] sm:$0xf]
        %v260 = vld [vmem:[#allocation5 + $0xc] sm:$0xf]
        %v265 = vunpack.c.l.b16 %v257
        %v266 = vunpack.c.l.b16 %v258
        %v267 = vunpack.c.l.b16 %v259
        %v268 = vunpack.c.l.b16 %v260
        %v269 = vpack.c.b16 %v266, %v265
        %v270 = vpack.c.b16 %v268, %v267
        %vm273 = vcmask 261120
        %v275 = vsel %vm273, %v256, 0
        %277 = vmatprep.subr.bf16.mxu0 0
        %278 = vmatpush1.bf16.msra.mxu0 %v269
        %279 = vmatprep.subr.bf16.mxu0 0
        %280 = vmatpush1.bf16.msra.mxu0 %v270
        %281 = vmatprep.subr.bf16.mxu0 0
        %282 = vmatpush1.bf16.msra.mxu0 0
        %283 = vmatprep.subr.bf16.mxu0 0
        %284 = vmatpush1.bf16.msra.mxu0 0
        %285 = vmatprep.subr.bf16.mxu0 0
        %286 = vmatpush1.bf16.msra.mxu0 0
        %287 = vmatprep.subr.bf16.mxu0 0
        %288 = vmatpush1.bf16.msra.mxu0 0
        %289 = vmatprep.subr.bf16.mxu0 0
        %290 = vmatpush1.bf16.msra.mxu0 0
        %291 = vmatprep.subr.bf16.mxu0 0
        %292 = vmatpush1.bf16.msra.mxu0 0
        %293 = vmatprep.subr.bf16.mxu0 0
        %294 = vmatpush1.bf16.msra.mxu0 0
        %295 = vmatprep.subr.bf16.mxu0 0
        %296 = vmatpush1.bf16.msra.mxu0 0
        %297 = vmatprep.subr.bf16.mxu0 0
        %298 = vmatpush1.bf16.msra.mxu0 0
        %299 = vmatprep.subr.bf16.mxu0 0
        %300 = vmatpush1.bf16.msra.mxu0 0
        %301 = vmatprep.subr.bf16.mxu0 0
        %302 = vmatpush1.bf16.msra.mxu0 0
        %303 = vmatprep.subr.bf16.mxu0 0
        %304 = vmatpush1.bf16.msra.mxu0 0
        %305 = vmatprep.subr.bf16.mxu0 0
        %306 = vmatpush1.bf16.msra.mxu0 0
        %307 = vmatprep.subr.bf16.mxu0 0
        %308 = vmatpush1.bf16.msra.mxu0 0
        %309 = vmatprep.mubr.bf16.mxu0 0
        %310 = vmatmul.mubr.bf16.gmra.mrb[0].mxu0 %v275
        %v311 = vpop.f32.mrb[0].mxu0
        %v312 = vadd.f32 0.0, %v311
        %v313 = vpop.f32.mrb[0].mxu0
        %v314 = vpop.f32.mrb[0].mxu0
        %v315 = vpop.f32.mrb[0].mxu0
        %316 = vdwg.mxu0
        %v317 = vpack.c.bf16 %v312, %v312
        %319 = vrot.lane.b32.xlu0 %v317, 96
        %v320 = vpop.permute.xlu0 %319
        %vm321 = vcmask 64512
        %v323 = vsel %vm321, %v317, 0
        %v326 = vsel %vm321, %v320, 0
        %328 = vmatprep.subr.bf16.mxu0 0
        %329 = vmatpush1.bf16.xpose.msra.mxu0 %v326
        %330 = vmatprep.subr.bf16.mxu0 0
        %331 = vmatpush1.bf16.xpose.msra.mxu0 0
        %332 = vmatprep.subr.bf16.mxu0 0
        %333 = vmatpush1.bf16.xpose.msra.mxu0 0
        %334 = vmatprep.subr.bf16.mxu0 0
        %335 = vmatpush1.bf16.xpose.msra.mxu0 0
        %336 = vmatprep.subr.bf16.mxu0 0
        %337 = vmatpush1.bf16.xpose.msra.mxu0 0
        %338 = vmatprep.subr.bf16.mxu0 0
        %339 = vmatpush1.bf16.xpose.msra.mxu0 0
        %340 = vmatprep.subr.bf16.mxu0 0
        %341 = vmatpush1.bf16.xpose.msra.mxu0 0
        %342 = vmatprep.subr.bf16.mxu0 0
        %343 = vmatpush1.bf16.xpose.msra.mxu0 0
        %344 = vmatprep.subr.bf16.mxu0 0
        %345 = vmatpush1.bf16.xpose.msra.mxu0 0
        %346 = vmatprep.subr.bf16.mxu0 0
        %347 = vmatpush1.bf16.xpose.msra.mxu0 0
        %348 = vmatprep.subr.bf16.mxu0 0
        %349 = vmatpush1.bf16.xpose.msra.mxu0 0
        %350 = vmatprep.subr.bf16.mxu0 0
        %351 = vmatpush1.bf16.xpose.msra.mxu0 0
        %352 = vmatprep.subr.bf16.mxu0 0
        %353 = vmatpush1.bf16.xpose.msra.mxu0 0
        %354 = vmatprep.subr.bf16.mxu0 0
        %355 = vmatpush1.bf16.xpose.msra.mxu0 0
        %356 = vmatprep.subr.bf16.mxu0 0
        %357 = vmatpush1.bf16.xpose.msra.mxu0 0
        %358 = vmatprep.subr.bf16.mxu0 0
        %359 = vmatpush1.bf16.xpose.msra.mxu0 0
        %360 = vmatprep.mubr.bf16.mxu0 0
        %361 = vmatmul.mubr.bf16.gmra.mrb[0].mxu0 %v323
        %v362 = vpop.f32.mrb[0].mxu0
        %v363 = vadd.f32 0.0, %v362
        %v364 = vpop.f32.mrb[0].mxu0
        %v365 = vpop.f32.mrb[0].mxu0
        %v366 = vpop.f32.mrb[0].mxu0
        %367 = vdwg.mxu0
        %v368 = vsel %vm321, %v363, -inf
        %369 = vmax.xlane.f32.xlu0 %v368
        %v370 = vpop.xlane.xlu0 %369
        %v371 = vsub.f32 %v363, %v370
        %v372 = vmul.f32 %v371, 1.442695
        %v373 = vpow.pop %v372
        %v374 = vsel %vm321, %v373, 0.0
        %375 = vadd.xlane.f32.xlu0 %v374
        %v376 = vpop.xlane.xlu0 %375
        %v377 = vrcp.pop %v376
        %v378 = vmul.f32 %v373, %v377
        %v379 = vpack.c.bf16 %v378, %v378
        %380 = vrot.lane.b32.xlu0 %v317, 64
        %v381 = vpop.permute.xlu0 %380
        %v383 = vsel %vm321, %v379, 0
        %vm385 = vcmask 1043456
        %v387 = vsel %vm385, %v381, 0
        %389 = vmatprep.subr.bf16.mxu0 0
        %390 = vmatpush1.bf16.msra.mxu0 %v387
        %391 = vmatprep.subr.bf16.mxu0 0
        %392 = vmatpush1.bf16.msra.mxu0 0
        %393 = vmatprep.subr.bf16.mxu0 0
        %394 = vmatpush1.bf16.msra.mxu0 0
        %395 = vmatprep.subr.bf16.mxu0 0
        %396 = vmatpush1.bf16.msra.mxu0 0
        %397 = vmatprep.subr.bf16.mxu0 0
        %398 = vmatpush1.bf16.msra.mxu0 0
        %399 = vmatprep.subr.bf16.mxu0 0
        %400 = vmatpush1.bf16.msra.mxu0 0
        %401 = vmatprep.subr.bf16.mxu0 0
        %402 = vmatpush1.bf16.msra.mxu0 0
        %403 = vmatprep.subr.bf16.mxu0 0
        %404 = vmatpush1.bf16.msra.mxu0 0
        %405 = vmatprep.subr.bf16.mxu0 0
        %406 = vmatpush1.bf16.msra.mxu0 0
        %407 = vmatprep.subr.bf16.mxu0 0
        %408 = vmatpush1.bf16.msra.mxu0 0
        %409 = vmatprep.subr.bf16.mxu0 0
        %410 = vmatpush1.bf16.msra.mxu0 0
        %411 = vmatprep.subr.bf16.mxu0 0
        %412 = vmatpush1.bf16.msra.mxu0 0
        %413 = vmatprep.subr.bf16.mxu0 0
        %414 = vmatpush1.bf16.msra.mxu0 0
        %415 = vmatprep.subr.bf16.mxu0 0
        %416 = vmatpush1.bf16.msra.mxu0 0
        %417 = vmatprep.subr.bf16.mxu0 0
        %418 = vmatpush1.bf16.msra.mxu0 0
        %419 = vmatprep.subr.bf16.mxu0 0
        %420 = vmatpush1.bf16.msra.mxu0 0
        %421 = vmatprep.mubr.bf16.mxu0 0
        %422 = vmatmul.mubr.bf16.gmra.mrb[0].mxu0 %v383
        %v423 = vpop.f32.mrb[0].mxu0
        %v424 = vadd.f32 0.0, %v423
        %v425 = vpop.f32.mrb[0].mxu0
        %v426 = vpop.f32.mrb[0].mxu0
        %v427 = vpop.f32.mrb[0].mxu0
        %428 = vdwg.mxu0
        %v429 = vpack.c.bf16 %v424, %v424
        %430 = vrot.lane.b32.xlu0 %v317, 120
        %v431 = vpop.permute.xlu0 %430
        %432 = vrot.lane.b32.xlu0 %v317, 88
        %v433 = vpop.permute.xlu0 %432
        %v435 = vsel %vm321, %v431, 0
        %v438 = vsel %vm321, %v433, 0
        %440 = vmatprep.subr.bf16.mxu0 0
        %441 = vmatpush1.bf16.xpose.msra.mxu0 %v438
        %442 = vmatprep.subr.bf16.mxu0 0
        %443 = vmatpush1.bf16.xpose.msra.mxu0 0
        %444 = vmatprep.subr.bf16.mxu0 0
        %445 = vmatpush1.bf16.xpose.msra.mxu0 0
        %446 = vmatprep.subr.bf16.mxu0 0
        %447 = vmatpush1.bf16.xpose.msra.mxu0 0
        %448 = vmatprep.subr.bf16.mxu0 0
        %449 = vmatpush1.bf16.xpose.msra.mxu0 0
        %450 = vmatprep.subr.bf16.mxu0 0
        %451 = vmatpush1.bf16.xpose.msra.mxu0 0
        %452 = vmatprep.subr.bf16.mxu0 0
        %453 = vmatpush1.bf16.xpose.msra.mxu0 0
        %454 = vmatprep.subr.bf16.mxu0 0
        %455 = vmatpush1.bf16.xpose.msra.mxu0 0
        %456 = vmatprep.subr.bf16.mxu0 0
        %457 = vmatpush1.bf16.xpose.msra.mxu0 0
        %458 = vmatprep.subr.bf16.mxu0 0
        %459 = vmatpush1.bf16.xpose.msra.mxu0 0
        %460 = vmatprep.subr.bf16.mxu0 0
        %461 = vmatpush1.bf16.xpose.msra.mxu0 0
        %462 = vmatprep.subr.bf16.mxu0 0
        %463 = vmatpush1.bf16.xpose.msra.mxu0 0
        %464 = vmatprep.subr.bf16.mxu0 0
        %465 = vmatpush1.bf16.xpose.msra.mxu0 0
        %466 = vmatprep.subr.bf16.mxu0 0
        %467 = vmatpush1.bf16.xpose.msra.mxu0 0
        %468 = vmatprep.subr.bf16.mxu0 0
        %469 = vmatpush1.bf16.xpose.msra.mxu0 0
        %470 = vmatprep.subr.bf16.mxu0 0
        %471 = vmatpush1.bf16.xpose.msra.mxu0 0
        %472 = vmatprep.mubr.bf16.mxu0 0
        %473 = vmatmul.mubr.bf16.gmra.mrb[0].mxu0 %v435
        %v474 = vpop.f32.mrb[0].mxu0
        %v475 = vadd.f32 0.0, %v474
        %v476 = vpop.f32.mrb[0].mxu0
        %v477 = vpop.f32.mrb[0].mxu0
        %v478 = vpop.f32.mrb[0].mxu0
        %479 = vdwg.mxu0
        %v480 = vsel %vm321, %v475, -inf
        %481 = vmax.xlane.f32.xlu0 %v480
        %v482 = vpop.xlane.xlu0 %481
        %v483 = vsub.f32 %v475, %v482
        %v484 = vmul.f32 %v483, 1.442695
        %v485 = vpow.pop %v484
        %v486 = vsel %vm321, %v485, 0.0
        %487 = vadd.xlane.f32.xlu0 %v486
        %v488 = vpop.xlane.xlu0 %487
        %v489 = vrcp.pop %v488
        %v490 = vmul.f32 %v485, %v489
        %v491 = vpack.c.bf16 %v490, %v490
        %492 = vrot.lane.b32.xlu0 %v317, 56
        %v493 = vpop.permute.xlu0 %492
        %v495 = vsel %vm321, %v491, 0
        %v498 = vsel %vm385, %v493, 0
        %500 = vmatprep.subr.bf16.mxu0 0
        %501 = vmatpush1.bf16.msra.mxu0 %v498
        %502 = vmatprep.subr.bf16.mxu0 0
        %503 = vmatpush1.bf16.msra.mxu0 0
        %504 = vmatprep.subr.bf16.mxu0 0
        %505 = vmatpush1.bf16.msra.mxu0 0
        %506 = vmatprep.subr.bf16.mxu0 0
        %507 = vmatpush1.bf16.msra.mxu0 0
        %508 = vmatprep.subr.bf16.mxu0 0
        %509 = vmatpush1.bf16.msra.mxu0 0
        %510 = vmatprep.subr.bf16.mxu0 0
        %511 = vmatpush1.bf16.msra.mxu0 0
        %512 = vmatprep.subr.bf16.mxu0 0
        %513 = vmatpush1.bf16.msra.mxu0 0
        %514 = vmatprep.subr.bf16.mxu0 0
        %515 = vmatpush1.bf16.msra.mxu0 0
        %516 = vmatprep.subr.bf16.mxu0 0
        %517 = vmatpush1.bf16.msra.mxu0 0
        %518 = vmatprep.subr.bf16.mxu0 0
        %519 = vmatpush1.bf16.msra.mxu0 0
        %520 = vmatprep.subr.bf16.mxu0 0
        %521 = vmatpush1.bf16.msra.mxu0 0
        %522 = vmatprep.subr.bf16.mxu0 0
        %523 = vmatpush1.bf16.msra.mxu0 0
        %524 = vmatprep.subr.bf16.mxu0 0
        %525 = vmatpush1.bf16.msra.mxu0 0
        %526 = vmatprep.subr.bf16.mxu0 0
        %527 = vmatpush1.bf16.msra.mxu0 0
        %528 = vmatprep.subr.bf16.mxu0 0
        %529 = vmatpush1.bf16.msra.mxu0 0
        %530 = vmatprep.subr.bf16.mxu0 0
        %531 = vmatpush1.bf16.msra.mxu0 0
        %532 = vmatprep.mubr.bf16.mxu0 0
        %533 = vmatmul.mubr.bf16.gmra.mrb[0].mxu0 %v495
        %v534 = vpop.f32.mrb[0].mxu0
        %v535 = vadd.f32 0.0, %v534
        %v536 = vpop.f32.mrb[0].mxu0
        %v537 = vpop.f32.mrb[0].mxu0
        %v538 = vpop.f32.mrb[0].mxu0
        %539 = vdwg.mxu0
        %v540 = vpack.c.bf16 %v535, %v535
        %541 = vrot.lane.b32.xlu0 %v317, 112
        %v542 = vpop.permute.xlu0 %541
        %543 = vrot.lane.b32.xlu0 %v317, 80
        %v544 = vpop.permute.xlu0 %543
        %v546 = vsel %vm321, %v542, 0
        %v549 = vsel %vm321, %v544, 0
        %551 = vmatprep.subr.bf16.mxu0 0
        %552 = vmatpush1.bf16.xpose.msra.mxu0 %v549
        %553 = vmatprep.subr.bf16.mxu0 0
        %554 = vmatpush1.bf16.xpose.msra.mxu0 0
        %555 = vmatprep.subr.bf16.mxu0 0
        %556 = vmatpush1.bf16.xpose.msra.mxu0 0
        %557 = vmatprep.subr.bf16.mxu0 0
        %558 = vmatpush1.bf16.xpose.msra.mxu0 0
        %559 = vmatprep.subr.bf16.mxu0 0
        %560 = vmatpush1.bf16.xpose.msra.mxu0 0
        %561 = vmatprep.subr.bf16.mxu0 0
        %562 = vmatpush1.bf16.xpose.msra.mxu0 0
        %563 = vmatprep.subr.bf16.mxu0 0
        %564 = vmatpush1.bf16.xpose.msra.mxu0 0
        %565 = vmatprep.subr.bf16.mxu0 0
        %566 = vmatpush1.bf16.xpose.msra.mxu0 0
        %567 = vmatprep.subr.bf16.mxu0 0
        %568 = vmatpush1.bf16.xpose.msra.mxu0 0
        %569 = vmatprep.subr.bf16.mxu0 0
        %570 = vmatpush1.bf16.xpose.msra.mxu0 0
        %571 = vmatprep.subr.bf16.mxu0 0
        %572 = vmatpush1.bf16.xpose.msra.mxu0 0
        %573 = vmatprep.subr.bf16.mxu0 0
        %574 = vmatpush1.bf16.xpose.msra.mxu0 0
        %575 = vmatprep.subr.bf16.mxu0 0
        %576 = vmatpush1.bf16.xpose.msra.mxu0 0
        %577 = vmatprep.subr.bf16.mxu0 0
        %578 = vmatpush1.bf16.xpose.msra.mxu0 0
        %579 = vmatprep.subr.bf16.mxu0 0
        %580 = vmatpush1.bf16.xpose.msra.mxu0 0
        %581 = vmatprep.subr.bf16.mxu0 0
        %582 = vmatpush1.bf16.xpose.msra.mxu0 0
        %583 = vmatprep.mubr.bf16.mxu0 0
        %584 = vmatmul.mubr.bf16.gmra.mrb[0].mxu0 %v546
        %v585 = vpop.f32.mrb[0].mxu0
        %v586 = vadd.f32 0.0, %v585
        %v587 = vpop.f32.mrb[0].mxu0
        %v588 = vpop.f32.mrb[0].mxu0
        %v589 = vpop.f32.mrb[0].mxu0
        %590 = vdwg.mxu0
        %v591 = vsel %vm321, %v586, -inf
        %592 = vmax.xlane.f32.xlu0 %v591
        %v593 = vpop.xlane.xlu0 %592
        %v594 = vsub.f32 %v586, %v593
        %v595 = vmul.f32 %v594, 1.442695
        %v596 = vpow.pop %v595
        %v597 = vsel %vm321, %v596, 0.0
        %598 = vadd.xlane.f32.xlu0 %v597
        %v599 = vpop.xlane.xlu0 %598
        %v600 = vrcp.pop %v599
        %v601 = vmul.f32 %v596, %v600
        %v602 = vpack.c.bf16 %v601, %v601
        %603 = vrot.lane.b32.xlu0 %v317, 48
        %v604 = vpop.permute.xlu0 %603
        %v606 = vsel %vm321, %v602, 0
        %v609 = vsel %vm385, %v604, 0
        %611 = vmatprep.subr.bf16.mxu0 0
        %612 = vmatpush1.bf16.msra.mxu0 %v609
        %613 = vmatprep.subr.bf16.mxu0 0
        %614 = vmatpush1.bf16.msra.mxu0 0
        %615 = vmatprep.subr.bf16.mxu0 0
        %616 = vmatpush1.bf16.msra.mxu0 0
        %617 = vmatprep.subr.bf16.mxu0 0
        %618 = vmatpush1.bf16.msra.mxu0 0
        %619 = vmatprep.subr.bf16.mxu0 0
        %620 = vmatpush1.bf16.msra.mxu0 0
        %621 = vmatprep.subr.bf16.mxu0 0
        %622 = vmatpush1.bf16.msra.mxu0 0
        %623 = vmatprep.subr.bf16.mxu0 0
        %624 = vmatpush1.bf16.msra.mxu0 0
        %625 = vmatprep.subr.bf16.mxu0 0
        %626 = vmatpush1.bf16.msra.mxu0 0
        %627 = vmatprep.subr.bf16.mxu0 0
        %628 = vmatpush1.bf16.msra.mxu0 0
        %629 = vmatprep.subr.bf16.mxu0 0
        %630 = vmatpush1.bf16.msra.mxu0 0
        %631 = vmatprep.subr.bf16.mxu0 0
        %632 = vmatpush1.bf16.msra.mxu0 0
        %633 = vmatprep.subr.bf16.mxu0 0
        %634 = vmatpush1.bf16.msra.mxu0 0
        %635 = vmatprep.subr.bf16.mxu0 0
        %636 = vmatpush1.bf16.msra.mxu0 0
        %637 = vmatprep.subr.bf16.mxu0 0
        %638 = vmatpush1.bf16.msra.mxu0 0
        %639 = vmatprep.subr.bf16.mxu0 0
        %640 = vmatpush1.bf16.msra.mxu0 0
        %641 = vmatprep.subr.bf16.mxu0 0
        %642 = vmatpush1.bf16.msra.mxu0 0
        %643 = vmatprep.mubr.bf16.mxu0 0
        %644 = vmatmul.mubr.bf16.gmra.mrb[0].mxu0 %v606
        %v645 = vpop.f32.mrb[0].mxu0
        %v646 = vadd.f32 0.0, %v645
        %v647 = vpop.f32.mrb[0].mxu0
        %v648 = vpop.f32.mrb[0].mxu0
        %v649 = vpop.f32.mrb[0].mxu0
        %650 = vdwg.mxu0
        %v651 = vpack.c.bf16 %v646, %v646
        %652 = vrot.lane.b32.xlu0 %v317, 104
        %v653 = vpop.permute.xlu0 %652
        %654 = vrot.lane.b32.xlu0 %v317, 72
        %v655 = vpop.permute.xlu0 %654
        %v657 = vsel %vm321, %v653, 0
        %v660 = vsel %vm321, %v655, 0
        %662 = vmatprep.subr.bf16.mxu0 0
        %663 = vmatpush1.bf16.xpose.msra.mxu0 %v660
        %664 = vmatprep.subr.bf16.mxu0 0
        %665 = vmatpush1.bf16.xpose.msra.mxu0 0
        %666 = vmatprep.subr.bf16.mxu0 0
        %667 = vmatpush1.bf16.xpose.msra.mxu0 0
        %668 = vmatprep.subr.bf16.mxu0 0
        %669 = vmatpush1.bf16.xpose.msra.mxu0 0
        %670 = vmatprep.subr.bf16.mxu0 0
        %671 = vmatpush1.bf16.xpose.msra.mxu0 0
        %672 = vmatprep.subr.bf16.mxu0 0
        %673 = vmatpush1.bf16.xpose.msra.mxu0 0
        %674 = vmatprep.subr.bf16.mxu0 0
        %675 = vmatpush1.bf16.xpose.msra.mxu0 0
        %676 = vmatprep.subr.bf16.mxu0 0
        %677 = vmatpush1.bf16.xpose.msra.mxu0 0
        %678 = vmatprep.subr.bf16.mxu0 0
        %679 = vmatpush1.bf16.xpose.msra.mxu0 0
        %680 = vmatprep.subr.bf16.mxu0 0
        %681 = vmatpush1.bf16.xpose.msra.mxu0 0
        %682 = vmatprep.subr.bf16.mxu0 0
        %683 = vmatpush1.bf16.xpose.msra.mxu0 0
        %684 = vmatprep.subr.bf16.mxu0 0
        %685 = vmatpush1.bf16.xpose.msra.mxu0 0
        %686 = vmatprep.subr.bf16.mxu0 0
        %687 = vmatpush1.bf16.xpose.msra.mxu0 0
        %688 = vmatprep.subr.bf16.mxu0 0
        %689 = vmatpush1.bf16.xpose.msra.mxu0 0
        %690 = vmatprep.subr.bf16.mxu0 0
        %691 = vmatpush1.bf16.xpose.msra.mxu0 0
        %692 = vmatprep.subr.bf16.mxu0 0
        %693 = vmatpush1.bf16.xpose.msra.mxu0 0
        %694 = vmatprep.mubr.bf16.mxu0 0
        %695 = vmatmul.mubr.bf16.gmra.mrb[0].mxu0 %v657
        %v696 = vpop.f32.mrb[0].mxu0
        %v697 = vadd.f32 0.0, %v696
        %v698 = vpop.f32.mrb[0].mxu0
        %v699 = vpop.f32.mrb[0].mxu0
        %v700 = vpop.f32.mrb[0].mxu0
        %701 = vdwg.mxu0
        %v702 = vsel %vm321, %v697, -inf
        %703 = vmax.xlane.f32.xlu0 %v702
        %v704 = vpop.xlane.xlu0 %703
        %v705 = vsub.f32 %v697, %v704
        %v706 = vmul.f32 %v705, 1.442695
        %v707 = vpow.pop %v706
        %v708 = vsel %vm321, %v707, 0.0
        %709 = vadd.xlane.f32.xlu0 %v708
        %v710 = vpop.xlane.xlu0 %709
        %v711 = vrcp.pop %v710
        %v712 = vmul.f32 %v707, %v711
        %v713 = vpack.c.bf16 %v712, %v712
        %714 = vrot.lane.b32.xlu0 %v317, 40
        %v715 = vpop.permute.xlu0 %714
        %v717 = vsel %vm321, %v713, 0
        %v720 = vsel %vm385, %v715, 0
        %722 = vmatprep.subr.bf16.mxu0 0
        %723 = vmatpush1.bf16.msra.mxu0 %v720
        %724 = vmatprep.subr.bf16.mxu0 0
        %725 = vmatpush1.bf16.msra.mxu0 0
        %726 = vmatprep.subr.bf16.mxu0 0
        %727 = vmatpush1.bf16.msra.mxu0 0
        %728 = vmatprep.subr.bf16.mxu0 0
        %729 = vmatpush1.bf16.msra.mxu0 0
        %730 = vmatprep.subr.bf16.mxu0 0
        %731 = vmatpush1.bf16.msra.mxu0 0
        %732 = vmatprep.subr.bf16.mxu0 0
        %733 = vmatpush1.bf16.msra.mxu0 0
        %734 = vmatprep.subr.bf16.mxu0 0
        %735 = vmatpush1.bf16.msra.mxu0 0
        %736 = vmatprep.subr.bf16.mxu0 0
        %737 = vmatpush1.bf16.msra.mxu0 0
        %738 = vmatprep.subr.bf16.mxu0 0
        %739 = vmatpush1.bf16.msra.mxu0 0
        %740 = vmatprep.subr.bf16.mxu0 0
        %741 = vmatpush1.bf16.msra.mxu0 0
        %742 = vmatprep.subr.bf16.mxu0 0
        %743 = vmatpush1.bf16.msra.mxu0 0
        %744 = vmatprep.subr.bf16.mxu0 0
        %745 = vmatpush1.bf16.msra.mxu0 0
        %746 = vmatprep.subr.bf16.mxu0 0
        %747 = vmatpush1.bf16.msra.mxu0 0
        %748 = vmatprep.subr.bf16.mxu0 0
        %749 = vmatpush1.bf16.msra.mxu0 0
        %750 = vmatprep.subr.bf16.mxu0 0
        %751 = vmatpush1.bf16.msra.mxu0 0
        %752 = vmatprep.subr.bf16.mxu0 0
        %753 = vmatpush1.bf16.msra.mxu0 0
        %754 = vmatprep.mubr.bf16.mxu0 0
        %755 = vmatmul.mubr.bf16.gmra.mrb[0].mxu0 %v717
        %v756 = vpop.f32.mrb[0].mxu0
        %v757 = vadd.f32 0.0, %v756
        %v758 = vpop.f32.mrb[0].mxu0
        %v759 = vpop.f32.mrb[0].mxu0
        %v760 = vpop.f32.mrb[0].mxu0
        %761 = vdwg.mxu0
        %v762 = vpack.c.bf16 %v757, %v757
        %764 = vrot.lane.b32.xlu0 %v540, 8
        %v765 = vpop.permute.xlu0 %764
        %767 = vrot.lane.b32.xlu0 %v651, 16
        %v768 = vpop.permute.xlu0 %767
        %770 = vrot.lane.b32.xlu0 %v762, 24
        %v771 = vpop.permute.xlu0 %770
        %v774 = vsel %vm321, %v429, %v765
        %vm775 = vcmask 130048
        %v777 = vsel %vm775, %v774, %v768
        %vm778 = vcmask 195584
        %v780 = vsel %vm778, %v777, %v771
        %v781 = vld [vmem:[#allocation7] sm:$0xf]
        %v782 = vld [vmem:[#allocation7 + $0x4] sm:$0xf]
        %v783 = vld [vmem:[#allocation7 + $0x8] sm:$0xf]
        %v784 = vld [vmem:[#allocation7 + $0xc] sm:$0xf]
        %v785 = vld [vmem:[#allocation8] sm:$0x1]
        %v787 = vlaneseq
        %v788 = vshrl.u32 %v787, 7
        %v789 = vsub.s32 0, %v788
        %v790 = vrot.slane %v785, %v789
        %v796 = vunpack.c.l.b16 %v781
        %v797 = vunpack.c.l.b16 %v782
        %v798 = vunpack.c.l.b16 %v783
        %v799 = vunpack.c.l.b16 %v784
        %v800 = vpack.c.b16 %v797, %v796
        %v801 = vpack.c.b16 %v799, %v798
        %v804 = vsel %vm273, %v780, 0
        %806 = vmatprep.subr.bf16.mxu0 0
        %807 = vmatpush1.bf16.msra.mxu0 %v800
        %808 = vmatprep.subr.bf16.mxu0 0
        %809 = vmatpush1.bf16.msra.mxu0 %v801
        %810 = vmatprep.subr.bf16.mxu0 0
        %811 = vmatpush1.bf16.msra.mxu0 0
        %812 = vmatprep.subr.bf16.mxu0 0
        %813 = vmatpush1.bf16.msra.mxu0 0
        %814 = vmatprep.subr.bf16.mxu0 0
        %815 = vmatpush1.bf16.msra.mxu0 0
        %816 = vmatprep.subr.bf16.mxu0 0
        %817 = vmatpush1.bf16.msra.mxu0 0
        %818 = vmatprep.subr.bf16.mxu0 0
        %819 = vmatpush1.bf16.msra.mxu0 0
        %820 = vmatprep.subr.bf16.mxu0 0
        %821 = vmatpush1.bf16.msra.mxu0 0
        %822 = vmatprep.subr.bf16.mxu0 0
        %823 = vmatpush1.bf16.msra.mxu0 0
        %824 = vmatprep.subr.bf16.mxu0 0
        %825 = vmatpush1.bf16.msra.mxu0 0
        %826 = vmatprep.subr.bf16.mxu0 0
        %827 = vmatpush1.bf16.msra.mxu0 0
        %828 = vmatprep.subr.bf16.mxu0 0
        %829 = vmatpush1.bf16.msra.mxu0 0
        %830 = vmatprep.subr.bf16.mxu0 0
        %831 = vmatpush1.bf16.msra.mxu0 0
        %832 = vmatprep.subr.bf16.mxu0 0
        %833 = vmatpush1.bf16.msra.mxu0 0
        %834 = vmatprep.subr.bf16.mxu0 0
        %835 = vmatpush1.bf16.msra.mxu0 0
        %836 = vmatprep.subr.bf16.mxu0 0
        %837 = vmatpush1.bf16.msra.mxu0 0
        %838 = vmatprep.mubr.bf16.mxu0 0
        %839 = vmatmul.mubr.bf16.gmra.mrb[0].mxu0 %v804
        %v840 = vpop.f32.mrb[0].mxu0
        %v841 = vadd.f32 %v790, %v840
        %v842 = vpop.f32.mrb[0].mxu0
        %v843 = vpop.f32.mrb[0].mxu0
        %v844 = vpop.f32.mrb[0].mxu0
        %845 = vdwg.mxu0
        %846 = vst.msk [vmem:[%s254] sm:$0xff] %vm273, %v841
        %s847 = sand.u32 %s120, 1
        %s848 = scalar_lea.sflag [#allocation4], %s847
        %s849 = sand.u32 %s120, 1
        %s850 = smul.addr %s849, 8
        %s851 = scalar_lea.vmem [#allocation10], %s850
        // Predicated region
        $region53: #{tpu_custom_call.1} parent=35 // pred_check
          %p852 = pneg %p130
        $region54: #{tpu_custom_call.1} parent=35 // pred_check_branch
          %854 = sbr.rel (%p852) target = $region56
        $region55: #{tpu_custom_call.1} parent=35 // pred_region
          %s856 = ssub.s32 128, 128
          %857 = vsyncadd %s848, %s856
          %s858 = smul.addr %s23, 128
          %s859 = scalar_lea.hbm %s4, %s858
          %s861 = sshll.u32 %s851, 4
          %s862 = int_to_ptr.vmem [resolvable:$true] %s861
          %864 = dma.vmem_to_hbm [thread:$0]  %s862, 128, %s859, %s848
        $region56: #{tpu_custom_call.1} parent=35 // pred_fallthru
          _
      $region36: #{tpu_custom_call.1} parent=5 // pred_fallthru
        _
      %p865 = scmp.le.s32.totalorder 2, %s18
      // Predicated region
      $region57: #{tpu_custom_call.1} parent=5 // pred_check
        %p866 = pneg %p865
      $region58: #{tpu_custom_call.1} parent=5 // pred_check_branch
        %868 = sbr.rel (%p866) target = $region60
      $region59: #{tpu_custom_call.1} parent=5 // pred_region
        %s869 = ssub.s32 %s18, 2
        // Predicated region
        $region61: #{tpu_custom_call.1} parent=59 // pred_check
          %p870 = pneg %p136
        $region62: #{tpu_custom_call.1} parent=59 // pred_check_branch
          %872 = sbr.rel (%p870) target = $region64
        $region63: #{tpu_custom_call.1} parent=59 // pred_region
          %s873 = sand.u32 %s121, 1
          %s874 = scalar_lea.sflag [#allocation4], %s873
          %s875 = sand.u32 %s121, 1
          %s876 = smul.addr %s875, 8
          %s877 = scalar_lea.vmem [#allocation10], %s876
          %878 = dma.done %s874, 128
        $region64: #{tpu_custom_call.1} parent=59 // pred_fallthru
          _
      $region60: #{tpu_custom_call.1} parent=5 // pred_fallthru
        _
    $region6: #{tpu_custom_call.1} parent=1 // loop_footer
      %s22 = sadd.s32 1, %s18
    $region7: #{tpu_custom_call.1} parent=1 // loop_footer_branch
      %17 = sbr.rel target = $region3
    $region8: #{tpu_custom_call.1} parent=1 // loop_exit
      _
    %879 = vsyncpa [#allocation3], 1
    %s880 = scalar_lea.sflag [#allocation3], 1
    %881 = vsyncpa %s880, 1
    %882 = vsyncpa [#allocation6], 1
    %883 = vsyncpa [#allocation9], 1
    %884 = vsyncpa [#allocation4], 1
    %s885 = scalar_lea.sflag [#allocation4], 1
    %886 = vsyncpa %s885, 1

</llo_original>
